<compile_context>
chip_gen: v7x
topology: tpu7x:2x2x1
jax: 0.10.0
libtpu: 0.0.40
codegen_flags: <defaults>
</compile_context>

<pallas_src>
import jax
import jax.numpy as jnp
from jax.experimental import pallas as pl
from jax.experimental.pallas import tpu as pltpu


def _weighted_avg_kernel(p_ref, x_ref, sx_ref, o_ref):
    # p_ref: (1,) f32 scalar in SMEM; x_ref/sx_ref/o_ref: (TM, TN) VMEM tiles.
    p = p_ref[0]
    o_ref[...] = (p * x_ref[...] + (1.0 - p) * sx_ref[...]).astype(o_ref.dtype)


# Lane-dense tile widths (multiples of 128, widest first, capped at 1024).
_TN_CANDIDATES = (1024, 896, 768, 640, 512, 384, 256, 128)


def _run_kernel_2d(param, x2, s2, tm, tn, core_parallel):
    """Blend two (M, TN) slabs with a 1-D row grid of (tm, tn) blocks."""
    m = x2.shape[0]
    grid = (pl.cdiv(m, tm),)
    sem = pltpu.CORE_PARALLEL if core_parallel else "parallel"
    return pl.pallas_call(
        _weighted_avg_kernel,
        out_shape=jax.ShapeDtypeStruct((m, tn), x2.dtype),
        grid_spec=pltpu.PrefetchScalarGridSpec(
            num_scalar_prefetch=0,
            grid=grid,
            in_specs=[
                pl.BlockSpec(memory_space=pltpu.MemorySpace.SMEM),  # param scalar
                pl.BlockSpec((tm, tn), lambda i: (i, 0)),           # x tile
                pl.BlockSpec((tm, tn), lambda i: (i, 0)),           # Sx tile
            ],
            out_specs=pl.BlockSpec((tm, tn), lambda i: (i, 0)),
        ),
        compiler_params=pltpu.CompilerParams(
            dimension_semantics=(sem,),
            # 3 arrays x 2 buffers x 4 MiB = 24 MiB at the (1024,1024) default;
            # explicit limit is required on v5e (16 MiB scoped default) and
            # leaves headroom on v7x (64 MiB physical VMEM).
            vmem_limit_bytes=32 * 1024 * 1024,
        ),
    )(param, x2, s2)


def weighted_average_term(param, x, sx, *, row_tile=1024, lane_tile=1024,
                          small_bytes_threshold=512 * 1024,
                          force_pallas=False, core_parallel=False):
    """param: (1,)-like scalar; x, sx: same shape/dtype (e.g. (B, C, H, W))."""
    assert x.shape == sx.shape and x.dtype == sx.dtype
    orig_shape = x.shape
    n = x.size
    param = jnp.asarray(param, jnp.float32).reshape((1,))

    def jnp_blend(a, b):
        p = param[0]
        return (p * a + (1.0 - p) * b).astype(a.dtype)

    # Tiny tensors: pallas_call launch + wrapper ops dominate; let XLA fuse it.
    if not force_pallas and n * jnp.dtype(x.dtype).itemsize < small_bytes_threshold:
        return jnp_blend(x, sx)

    # Pick TN as a multiple-of-128 divisor of numel so the (M, TN) view of the
    # contiguous flat array is a free reshape (covers the common NCHW case
    # where H*W is 128-aligned).
    tn = None
    for cand in _TN_CANDIDATES:
        if cand <= lane_tile and n % cand == 0:
            tn = cand
            break

    xf = x.reshape(-1)
    sf = sx.reshape(-1)

    if tn is not None:
        m = n // tn
        tm = min(row_tile, m)
        out2 = _run_kernel_2d(param, xf.reshape(m, tn), sf.reshape(m, tn),
                              tm, tn, core_parallel)
        return out2.reshape(orig_shape)

    # No multiple-of-128 divisor: run the kernel over the TN-aligned prefix and
    # blend the (< TN element) tail with plain jnp.  No full-array pad copies.
    tn = min(lane_tile, _TN_CANDIDATES[0])
    m = n // tn
    if m == 0:
        return jnp_blend(x, sx)
    n_main = m * tn
    tm = min(row_tile, m)
    out_main = _run_kernel_2d(param, xf[:n_main].reshape(m, tn),
                              sf[:n_main].reshape(m, tn), tm, tn, core_parallel)
    out_tail = jnp_blend(xf[n_main:], sf[n_main:])
    return jnp.concatenate([out_main.reshape(-1), out_tail]).reshape(orig_shape)


if __name__ == "__main__":
    key = jax.random.PRNGKey(0)
    k1, k2, k3, k4, k5, k6 = jax.random.split(key, 6)

    def ref(p, a, b):
        return p[0] * a + (1.0 - p[0]) * b

    param_test = jnp.array([0.3], dtype=jnp.float32)
    param_init = jnp.ones((1,), dtype=jnp.float32)   # torch.nn.Parameter(torch.ones(1))

    # 1) Typical NCHW activation with 128-aligned H*W -> zero-copy Pallas path.
    x1 = jax.random.normal(k1, (2, 8, 128, 128), dtype=jnp.float32)
    s1 = jax.random.normal(k2, (2, 8, 128, 128), dtype=jnp.float32)
    o1 = jax.block_until_ready(weighted_average_term(param_test, x1, s1))
    assert o1.shape == x1.shape and o1.dtype == x1.dtype
    assert jnp.allclose(o1, ref(param_test, x1, s1), atol=1e-6, rtol=1e-6)

    #    param = 1 (module init) -> output == x.
    o1i = jax.block_until_ready(weighted_average_term(param_init, x1, s1))
    assert jnp.allclose(o1i, x1, atol=1e-6, rtol=1e-6)

    #    Same shape forced through a multi-step row grid (row_tile=64 -> 4 blocks).
    o1t = jax.block_until_ready(
        weighted_average_term(param_test, x1, s1, row_tile=64))
    assert jnp.allclose(o1t, ref(param_test, x1, s1), atol=1e-6, rtol=1e-6)

    # 2) Small NCHW input (module's typical small case): jnp fast path,
    #    plus the same shape forced through the kernel (single full-array block).
    x2 = jax.random.normal(k3, (2, 4, 16, 16), dtype=jnp.float32)
    s2 = jax.random.normal(k4, (2, 4, 16, 16), dtype=jnp.float32)
    o2 = jax.block_until_ready(weighted_average_term(param_test, x2, s2))
    o2k = jax.block_until_ready(
        weighted_average_term(param_test, x2, s2, force_pallas=True))
    assert jnp.allclose(o2, ref(param_test, x2, s2), atol=1e-6, rtol=1e-6)
    assert jnp.allclose(o2k, ref(param_test, x2, s2), atol=1e-6, rtol=1e-6)

    # 3) Non-128-divisible size forced through the kernel: prefix + jnp tail.
    x3 = jax.random.normal(k5, (1, 3, 40, 40), dtype=jnp.float32)   # 4800 elems
    s3 = jax.random.normal(k6, (1, 3, 40, 40), dtype=jnp.float32)
    o3 = jax.block_until_ready(
        weighted_average_term(param_test, x3, s3, force_pallas=True))
    assert o3.shape == x3.shape and o3.dtype == x3.dtype
    assert jnp.allclose(o3, ref(param_test, x3, s3), atol=1e-6, rtol=1e-6)

    print("KERNEL_OK")
</pallas_src>

<mosaic_0001>
module attributes {stable_mosaic.version = 11 : i64} {
  func.func @_weighted_avg_kernel(%arg0: i32, %arg1: memref<1xf32, #tpu.memory_space<smem>>, %arg2: memref<256x1024xf32, #tpu.memory_space<vmem>>, %arg3: memref<256x1024xf32, #tpu.memory_space<vmem>>, %arg4: memref<256x1024xf32, #tpu.memory_space<vmem>>) attributes {dimension_semantics = [#tpu.dimension_semantics<parallel>], iteration_bounds = array<i64: 1>, scalar_prefetch = 0 : i64, scratch_operands = 0 : i64, tpu.core_type = #tpu.core_type<tc>, window_params = [{transform_indices = @transform_0, window_bounds = array<i64: 1>}, {transform_indices = @transform_1, window_bounds = array<i64: 256, 1024>}, {transform_indices = @transform_2, window_bounds = array<i64: 256, 1024>}, {transform_indices = @transform_3, window_bounds = array<i64: 256, 1024>}]} {
    %c0 = arith.constant 0 : index
    %0 = memref.load %arg1[%c0] : memref<1xf32, #tpu.memory_space<smem>>
    %c0_0 = arith.constant 0 : index
    %c0_1 = arith.constant 0 : index
    %1 = vector.load %arg2[%c0_0, %c0_1] : memref<256x1024xf32, #tpu.memory_space<vmem>>, vector<256x1024xf32>
    %2 = vector.broadcast %0 : f32 to vector<256x1024xf32>
    %3 = arith.mulf %2, %1 : vector<256x1024xf32>
    %cst = arith.constant 1.000000e+00 : f32
    %4 = arith.subf %cst, %0 : f32
    %c0_2 = arith.constant 0 : index
    %c0_3 = arith.constant 0 : index
    %5 = vector.load %arg3[%c0_2, %c0_3] : memref<256x1024xf32, #tpu.memory_space<vmem>>, vector<256x1024xf32>
    %6 = vector.broadcast %4 : f32 to vector<256x1024xf32>
    %7 = arith.mulf %6, %5 : vector<256x1024xf32>
    %8 = arith.addf %3, %7 : vector<256x1024xf32>
    %c0_4 = arith.constant 0 : index
    %c0_5 = arith.constant 0 : index
    %9 = vector.load %arg4[%c0_4, %c0_5] : memref<256x1024xf32, #tpu.memory_space<vmem>>, vector<256x1024xf32>
    tpu.vector_store %arg4[%c0_4, %c0_5], %8 {strides = array<i32>} : memref<256x1024xf32, #tpu.memory_space<vmem>>, vector<256x1024xf32>,
    return
  }
  func.func @transform_0(%arg0: i32) -> i32 {
    %c0_i32 = arith.constant 0 : i32
    %c0_i32_0 = arith.constant 0 : i32
    return %c0_i32 : i32
  }
  func.func @transform_1(%arg0: i32) -> (i32, i32) {
    %c0_i32 = arith.constant 0 : i32
    %c0_i32_0 = arith.constant 0 : i32
    return %arg0, %c0_i32 : i32, i32
  }
  func.func @transform_2(%arg0: i32) -> (i32, i32) {
    %c0_i32 = arith.constant 0 : i32
    %c0_i32_0 = arith.constant 0 : i32
    return %arg0, %c0_i32 : i32, i32
  }
  func.func @transform_3(%arg0: i32) -> (i32, i32) {
    %c0_i32 = arith.constant 0 : i32
    %c0_i32_0 = arith.constant 0 : i32
    return %arg0, %c0_i32 : i32, i32
  }
}

</mosaic_0001>

<llo_original>
// kernel: tpu_custom_call.1
$region0: #{tpu_custom_call.1}
  #allocation0 [shape = 'u32[]', space=smem, size = 0x4, offset = 0x4, fixed_abs, tag = 'smem constant byte address 0x4 - core index']
  #allocation1 [shape = 'u32[144,128]{1,0:T(1,128)}', space=vmem, size = 0x12000, scoped, tag = 'internal scratch']
  #allocation2 [shape = 'f32[1]{0:T(128)S(6)}', space=smem, size = 0x200, scoped, tag = 'scoped memory for tpu_custom_call.1']
  %s0 = inlined_call_operand.<no memory space> [shape: f32[1], index: 0, kind: input, shape index: {}]
  %s1 = inlined_call_operand.hbm [shape: f32[256,1024], index: 1, kind: input, shape index: {}]
  %s2 = inlined_call_operand.hbm [shape: f32[256,1024], index: 2, kind: input, shape index: {}]
  %s3 = inlined_call_operand.hbm [shape: f32[256,1024], index: 3, kind: output, shape index: {}]
  %s4 = sld [smem:[#allocation0]]
  $region30: #{tpu_custom_call.1} parent=0
    _
  %s6 = ssub.s32 1, %s4
  %s7 = scalar_select 0, %s6, %s4
  %8 = sst [smem:[#allocation2]] %s0
  $region1: #{tpu_custom_call.1} parent=0
    #allocation3 [shape = 'u8[1048576]{0}', space=vmem, size = 0x100000, scoped, tag = 'input window, operand 1, single buffered']
    #allocation4 [shape = 's32[1]{0}', space=sflag, size = 0x4, scoped, tag = 'scoped memory for tpu_custom_call.1']
    #allocation5 [shape = 's32[1]{0}', space=sflag, size = 0x4, scoped, tag = 'scoped memory for tpu_custom_call.1']
    #allocation6 [shape = 'u8[1048576]{0}', space=vmem, size = 0x100000, scoped, tag = 'input window, operand 2, single buffered']
    #allocation7 [shape = 's32[1]{0}', space=sflag, size = 0x4, scoped, tag = 'scoped memory for tpu_custom_call.1']
    #allocation8 [shape = 'u8[1048576]{0}', space=vmem, size = 0x100000, scoped, tag = 'output window, operand 0, single buffered']
    %9 = vsyncpa [#allocation4], 0
    %10 = vsyncpa [#allocation7], 0
    %11 = vsyncpa [#allocation5], 0
    // Predicated region
    $region2: #{tpu_custom_call.1} parent=1 // pred_check
      _
    $region3: #{tpu_custom_call.1} parent=1 // pred_check_branch
      %13 = sbr.rel (0) target = $region5
    $region4: #{tpu_custom_call.1} parent=1 // pred_region
      _
    $region5: #{tpu_custom_call.1} parent=1 // pred_fallthru
      _
    // Predicated region
    $region6: #{tpu_custom_call.1} parent=1 // pred_check
      _
    $region7: #{tpu_custom_call.1} parent=1 // pred_check_branch
      %15 = sbr.rel (0) target = $region9
    $region8: #{tpu_custom_call.1} parent=1 // pred_region
      %s17 = ssub.s32 32768, 32768
      %18 = vsyncadd [#allocation4], %s17
      %s19 = sshll.u32 [#allocation3], 4
      %s20 = int_to_ptr.vmem [resolvable:$true] %s19
      %25 = dma.hbm_to_vmem [thread:$0]  %s1, 32768, %s20, [#allocation4], 1024, 1024, 64
    $region9: #{tpu_custom_call.1} parent=1 // pred_fallthru
      _
    // Predicated region
    $region10: #{tpu_custom_call.1} parent=1 // pred_check
      _
    $region11: #{tpu_custom_call.1} parent=1 // pred_check_branch
      %27 = sbr.rel (0) target = $region13
    $region12: #{tpu_custom_call.1} parent=1 // pred_region
      %s29 = ssub.s32 32768, 32768
      %30 = vsyncadd [#allocation7], %s29
      %s31 = sshll.u32 [#allocation6], 4
      %s32 = int_to_ptr.vmem [resolvable:$true] %s31
      %37 = dma.hbm_to_vmem [thread:$0]  %s2, 32768, %s32, [#allocation7], 1024, 1024, 64
    $region13: #{tpu_custom_call.1} parent=1 // pred_fallthru
      _
    // Predicated region
    $region14: #{tpu_custom_call.1} parent=1 // pred_check
      _
    $region15: #{tpu_custom_call.1} parent=1 // pred_check_branch
      %39 = sbr.rel (0) target = $region17
    $region16: #{tpu_custom_call.1} parent=1 // pred_region
      %40 = dma.done [#allocation4], 32768
    $region17: #{tpu_custom_call.1} parent=1 // pred_fallthru
      _
    // Predicated region
    $region18: #{tpu_custom_call.1} parent=1 // pred_check
      _
    $region19: #{tpu_custom_call.1} parent=1 // pred_check_branch
      %42 = sbr.rel (0) target = $region21
    $region20: #{tpu_custom_call.1} parent=1 // pred_region
      %43 = dma.done [#allocation7], 32768
    $region21: #{tpu_custom_call.1} parent=1 // pred_fallthru
      _
    %s44 = sld [smem:[#allocation2]]
    %v45 = vld [vmem:[#allocation3] sm:$0xff]
    %v46 = vld [vmem:[#allocation3 + $0x8] sm:$0xff]
    %v47 = vld [vmem:[#allocation3 + $0x10] sm:$0xff]
    %v48 = vld [vmem:[#allocation3 + $0x18] sm:$0xff]
    %v49 = vld [vmem:[#allocation3 + $0x20] sm:$0xff]
    %v50 = vld [vmem:[#allocation3 + $0x28] sm:$0xff]
    %v51 = vld [vmem:[#allocation3 + $0x30] sm:$0xff]
    %v52 = vld [vmem:[#allocation3 + $0x38] sm:$0xff]
    %v53 = vld [vmem:[#allocation3 + $0x40] sm:$0xff]
    %v54 = vld [vmem:[#allocation3 + $0x48] sm:$0xff]
    %v55 = vld [vmem:[#allocation3 + $0x50] sm:$0xff]
    %v56 = vld [vmem:[#allocation3 + $0x58] sm:$0xff]
    %v57 = vld [vmem:[#allocation3 + $0x60] sm:$0xff]
    %v58 = vld [vmem:[#allocation3 + $0x68] sm:$0xff]
    %v59 = vld [vmem:[#allocation3 + $0x70] sm:$0xff]
    %v60 = vld [vmem:[#allocation3 + $0x78] sm:$0xff]
    %v61 = vld [vmem:[#allocation3 + $0x80] sm:$0xff]
    %v62 = vld [vmem:[#allocation3 + $0x88] sm:$0xff]
    %v63 = vld [vmem:[#allocation3 + $0x90] sm:$0xff]
    %v64 = vld [vmem:[#allocation3 + $0x98] sm:$0xff]
    %v65 = vld [vmem:[#allocation3 + $0xa0] sm:$0xff]
    %v66 = vld [vmem:[#allocation3 + $0xa8] sm:$0xff]
    %v67 = vld [vmem:[#allocation3 + $0xb0] sm:$0xff]
    %v68 = vld [vmem:[#allocation3 + $0xb8] sm:$0xff]
    %v69 = vld [vmem:[#allocation3 + $0xc0] sm:$0xff]
    %v70 = vld [vmem:[#allocation3 + $0xc8] sm:$0xff]
    %v71 = vld [vmem:[#allocation3 + $0xd0] sm:$0xff]
    %v72 = vld [vmem:[#allocation3 + $0xd8] sm:$0xff]
    %v73 = vld [vmem:[#allocation3 + $0xe0] sm:$0xff]
    %v74 = vld [vmem:[#allocation3 + $0xe8] sm:$0xff]
    %v75 = vld [vmem:[#allocation3 + $0xf0] sm:$0xff]
    %v76 = vld [vmem:[#allocation3 + $0xf8] sm:$0xff]
    %v77 = vld [vmem:[#allocation3 + $0x100] sm:$0xff]
    %v78 = vld [vmem:[#allocation3 + $0x108] sm:$0xff]
    %v79 = vld [vmem:[#allocation3 + $0x110] sm:$0xff]
    %v80 = vld [vmem:[#allocation3 + $0x118] sm:$0xff]
    %v81 = vld [vmem:[#allocation3 + $0x120] sm:$0xff]
    %v82 = vld [vmem:[#allocation3 + $0x128] sm:$0xff]
    %v83 = vld [vmem:[#allocation3 + $0x130] sm:$0xff]
    %v84 = vld [vmem:[#allocation3 + $0x138] sm:$0xff]
    %v85 = vld [vmem:[#allocation3 + $0x140] sm:$0xff]
    %v86 = vld [vmem:[#allocation3 + $0x148] sm:$0xff]
    %v87 = vld [vmem:[#allocation3 + $0x150] sm:$0xff]
    %v88 = vld [vmem:[#allocation3 + $0x158] sm:$0xff]
    %v89 = vld [vmem:[#allocation3 + $0x160] sm:$0xff]
    %v90 = vld [vmem:[#allocation3 + $0x168] sm:$0xff]
    %v91 = vld [vmem:[#allocation3 + $0x170] sm:$0xff]
    %v92 = vld [vmem:[#allocation3 + $0x178] sm:$0xff]
    %v93 = vld [vmem:[#allocation3 + $0x180] sm:$0xff]
    %v94 = vld [vmem:[#allocation3 + $0x188] sm:$0xff]
    %v95 = vld [vmem:[#allocation3 + $0x190] sm:$0xff]
    %v96 = vld [vmem:[#allocation3 + $0x198] sm:$0xff]
    %v97 = vld [vmem:[#allocation3 + $0x1a0] sm:$0xff]
    %v98 = vld [vmem:[#allocation3 + $0x1a8] sm:$0xff]
    %v99 = vld [vmem:[#allocation3 + $0x1b0] sm:$0xff]
    %v100 = vld [vmem:[#allocation3 + $0x1b8] sm:$0xff]
    %v101 = vld [vmem:[#allocation3 + $0x1c0] sm:$0xff]
    %v102 = vld [vmem:[#allocation3 + $0x1c8] sm:$0xff]
    %v103 = vld [vmem:[#allocation3 + $0x1d0] sm:$0xff]
    %v104 = vld [vmem:[#allocation3 + $0x1d8] sm:$0xff]
    %v105 = vld [vmem:[#allocation3 + $0x1e0] sm:$0xff]
    %v106 = vld [vmem:[#allocation3 + $0x1e8] sm:$0xff]
    %v107 = vld [vmem:[#allocation3 + $0x1f0] sm:$0xff]
    %v108 = vld [vmem:[#allocation3 + $0x1f8] sm:$0xff]
    %v109 = vld [vmem:[#allocation3 + $0x200] sm:$0xff]
    %v110 = vld [vmem:[#allocation3 + $0x208] sm:$0xff]
    %v111 = vld [vmem:[#allocation3 + $0x210] sm:$0xff]
    %v112 = vld [vmem:[#allocation3 + $0x218] sm:$0xff]
    %v113 = vld [vmem:[#allocation3 + $0x220] sm:$0xff]
    %v114 = vld [vmem:[#allocation3 + $0x228] sm:$0xff]
    %v115 = vld [vmem:[#allocation3 + $0x230] sm:$0xff]
    %v116 = vld [vmem:[#allocation3 + $0x238] sm:$0xff]
    %v117 = vld [vmem:[#allocation3 + $0x240] sm:$0xff]
    %v118 = vld [vmem:[#allocation3 + $0x248] sm:$0xff]
    %v119 = vld [vmem:[#allocation3 + $0x250] sm:$0xff]
    %v120 = vld [vmem:[#allocation3 + $0x258] sm:$0xff]
    %v121 = vld [vmem:[#allocation3 + $0x260] sm:$0xff]
    %v122 = vld [vmem:[#allocation3 + $0x268] sm:$0xff]
    %v123 = vld [vmem:[#allocation3 + $0x270] sm:$0xff]
    %v124 = vld [vmem:[#allocation3 + $0x278] sm:$0xff]
    %v125 = vld [vmem:[#allocation3 + $0x280] sm:$0xff]
    %v126 = vld [vmem:[#allocation3 + $0x288] sm:$0xff]
    %v127 = vld [vmem:[#allocation3 + $0x290] sm:$0xff]
    %v128 = vld [vmem:[#allocation3 + $0x298] sm:$0xff]
    %v129 = vld [vmem:[#allocation3 + $0x2a0] sm:$0xff]
    %v130 = vld [vmem:[#allocation3 + $0x2a8] sm:$0xff]
    %v131 = vld [vmem:[#allocation3 + $0x2b0] sm:$0xff]
    %v132 = vld [vmem:[#allocation3 + $0x2b8] sm:$0xff]
    %v133 = vld [vmem:[#allocation3 + $0x2c0] sm:$0xff]
    %v134 = vld [vmem:[#allocation3 + $0x2c8] sm:$0xff]
    %v135 = vld [vmem:[#allocation3 + $0x2d0] sm:$0xff]
    %v136 = vld [vmem:[#allocation3 + $0x2d8] sm:$0xff]
    %v137 = vld [vmem:[#allocation3 + $0x2e0] sm:$0xff]
    %v138 = vld [vmem:[#allocation3 + $0x2e8] sm:$0xff]
    %v139 = vld [vmem:[#allocation3 + $0x2f0] sm:$0xff]
    %v140 = vld [vmem:[#allocation3 + $0x2f8] sm:$0xff]
    %v141 = vld [vmem:[#allocation3 + $0x300] sm:$0xff]
    %v142 = vld [vmem:[#allocation3 + $0x308] sm:$0xff]
    %v143 = vld [vmem:[#allocation3 + $0x310] sm:$0xff]
    %v144 = vld [vmem:[#allocation3 + $0x318] sm:$0xff]
    %v145 = vld [vmem:[#allocation3 + $0x320] sm:$0xff]
    %v146 = vld [vmem:[#allocation3 + $0x328] sm:$0xff]
    %v147 = vld [vmem:[#allocation3 + $0x330] sm:$0xff]
    %v148 = vld [vmem:[#allocation3 + $0x338] sm:$0xff]
    %v149 = vld [vmem:[#allocation3 + $0x340] sm:$0xff]
    %v150 = vld [vmem:[#allocation3 + $0x348] sm:$0xff]
    %v151 = vld [vmem:[#allocation3 + $0x350] sm:$0xff]
    %v152 = vld [vmem:[#allocation3 + $0x358] sm:$0xff]
    %v153 = vld [vmem:[#allocation3 + $0x360] sm:$0xff]
    %v154 = vld [vmem:[#allocation3 + $0x368] sm:$0xff]
    %v155 = vld [vmem:[#allocation3 + $0x370] sm:$0xff]
    %v156 = vld [vmem:[#allocation3 + $0x378] sm:$0xff]
    %v157 = vld [vmem:[#allocation3 + $0x380] sm:$0xff]
    %v158 = vld [vmem:[#allocation3 + $0x388] sm:$0xff]
    %v159 = vld [vmem:[#allocation3 + $0x390] sm:$0xff]
    %v160 = vld [vmem:[#allocation3 + $0x398] sm:$0xff]
    %v161 = vld [vmem:[#allocation3 + $0x3a0] sm:$0xff]
    %v162 = vld [vmem:[#allocation3 + $0x3a8] sm:$0xff]
    %v163 = vld [vmem:[#allocation3 + $0x3b0] sm:$0xff]
    %v164 = vld [vmem:[#allocation3 + $0x3b8] sm:$0xff]
    %v165 = vld [vmem:[#allocation3 + $0x3c0] sm:$0xff]
    %v166 = vld [vmem:[#allocation3 + $0x3c8] sm:$0xff]
    %v167 = vld [vmem:[#allocation3 + $0x3d0] sm:$0xff]
    %v168 = vld [vmem:[#allocation3 + $0x3d8] sm:$0xff]
    %v169 = vld [vmem:[#allocation3 + $0x3e0] sm:$0xff]
    %v170 = vld [vmem:[#allocation3 + $0x3e8] sm:$0xff]
    %v171 = vld [vmem:[#allocation3 + $0x3f0] sm:$0xff]
    %v172 = vld [vmem:[#allocation3 + $0x3f8] sm:$0xff]
    %v173 = vld [vmem:[#allocation3 + $0x400] sm:$0xff]
    %v174 = vld [vmem:[#allocation3 + $0x408] sm:$0xff]
    %v175 = vld [vmem:[#allocation3 + $0x410] sm:$0xff]
    %v176 = vld [vmem:[#allocation3 + $0x418] sm:$0xff]
    %v177 = vld [vmem:[#allocation3 + $0x420] sm:$0xff]
    %v178 = vld [vmem:[#allocation3 + $0x428] sm:$0xff]
    %v179 = vld [vmem:[#allocation3 + $0x430] sm:$0xff]
    %v180 = vld [vmem:[#allocation3 + $0x438] sm:$0xff]
    %v181 = vld [vmem:[#allocation3 + $0x440] sm:$0xff]
    %v182 = vld [vmem:[#allocation3 + $0x448] sm:$0xff]
    %v183 = vld [vmem:[#allocation3 + $0x450] sm:$0xff]
    %v184 = vld [vmem:[#allocation3 + $0x458] sm:$0xff]
    %v185 = vld [vmem:[#allocation3 + $0x460] sm:$0xff]
    %v186 = vld [vmem:[#allocation3 + $0x468] sm:$0xff]
    %v187 = vld [vmem:[#allocation3 + $0x470] sm:$0xff]
    %v188 = vld [vmem:[#allocation3 + $0x478] sm:$0xff]
    %v189 = vld [vmem:[#allocation3 + $0x480] sm:$0xff]
    %v190 = vld [vmem:[#allocation3 + $0x488] sm:$0xff]
    %v191 = vld [vmem:[#allocation3 + $0x490] sm:$0xff]
    %v192 = vld [vmem:[#allocation3 + $0x498] sm:$0xff]
    %v193 = vld [vmem:[#allocation3 + $0x4a0] sm:$0xff]
    %v194 = vld [vmem:[#allocation3 + $0x4a8] sm:$0xff]
    %v195 = vld [vmem:[#allocation3 + $0x4b0] sm:$0xff]
    %v196 = vld [vmem:[#allocation3 + $0x4b8] sm:$0xff]
    %v197 = vld [vmem:[#allocation3 + $0x4c0] sm:$0xff]
    %v198 = vld [vmem:[#allocation3 + $0x4c8] sm:$0xff]
    %v199 = vld [vmem:[#allocation3 + $0x4d0] sm:$0xff]
    %v200 = vld [vmem:[#allocation3 + $0x4d8] sm:$0xff]
    %v201 = vld [vmem:[#allocation3 + $0x4e0] sm:$0xff]
    %v202 = vld [vmem:[#allocation3 + $0x4e8] sm:$0xff]
    %v203 = vld [vmem:[#allocation3 + $0x4f0] sm:$0xff]
    %v204 = vld [vmem:[#allocation3 + $0x4f8] sm:$0xff]
    %v205 = vld [vmem:[#allocation3 + $0x500] sm:$0xff]
    %v206 = vld [vmem:[#allocation3 + $0x508] sm:$0xff]
    %v207 = vld [vmem:[#allocation3 + $0x510] sm:$0xff]
    %v208 = vld [vmem:[#allocation3 + $0x518] sm:$0xff]
    %v209 = vld [vmem:[#allocation3 + $0x520] sm:$0xff]
    %v210 = vld [vmem:[#allocation3 + $0x528] sm:$0xff]
    %v211 = vld [vmem:[#allocation3 + $0x530] sm:$0xff]
    %v212 = vld [vmem:[#allocation3 + $0x538] sm:$0xff]
    %v213 = vld [vmem:[#allocation3 + $0x540] sm:$0xff]
    %v214 = vld [vmem:[#allocation3 + $0x548] sm:$0xff]
    %v215 = vld [vmem:[#allocation3 + $0x550] sm:$0xff]
    %v216 = vld [vmem:[#allocation3 + $0x558] sm:$0xff]
    %v217 = vld [vmem:[#allocation3 + $0x560] sm:$0xff]
    %v218 = vld [vmem:[#allocation3 + $0x568] sm:$0xff]
    %v219 = vld [vmem:[#allocation3 + $0x570] sm:$0xff]
    %v220 = vld [vmem:[#allocation3 + $0x578] sm:$0xff]
    %v221 = vld [vmem:[#allocation3 + $0x580] sm:$0xff]
    %v222 = vld [vmem:[#allocation3 + $0x588] sm:$0xff]
    %v223 = vld [vmem:[#allocation3 + $0x590] sm:$0xff]
    %v224 = vld [vmem:[#allocation3 + $0x598] sm:$0xff]
    %v225 = vld [vmem:[#allocation3 + $0x5a0] sm:$0xff]
    %v226 = vld [vmem:[#allocation3 + $0x5a8] sm:$0xff]
    %v227 = vld [vmem:[#allocation3 + $0x5b0] sm:$0xff]
    %v228 = vld [vmem:[#allocation3 + $0x5b8] sm:$0xff]
    %v229 = vld [vmem:[#allocation3 + $0x5c0] sm:$0xff]
    %v230 = vld [vmem:[#allocation3 + $0x5c8] sm:$0xff]
    %v231 = vld [vmem:[#allocation3 + $0x5d0] sm:$0xff]
    %v232 = vld [vmem:[#allocation3 + $0x5d8] sm:$0xff]
    %v233 = vld [vmem:[#allocation3 + $0x5e0] sm:$0xff]
    %v234 = vld [vmem:[#allocation3 + $0x5e8] sm:$0xff]
    %v235 = vld [vmem:[#allocation3 + $0x5f0] sm:$0xff]
    %v236 = vld [vmem:[#allocation3 + $0x5f8] sm:$0xff]
    %v237 = vld [vmem:[#allocation3 + $0x600] sm:$0xff]
    %v238 = vld [vmem:[#allocation3 + $0x608] sm:$0xff]
    %v239 = vld [vmem:[#allocation3 + $0x610] sm:$0xff]
    %v240 = vld [vmem:[#allocation3 + $0x618] sm:$0xff]
    %v241 = vld [vmem:[#allocation3 + $0x620] sm:$0xff]
    %v242 = vld [vmem:[#allocation3 + $0x628] sm:$0xff]
    %v243 = vld [vmem:[#allocation3 + $0x630] sm:$0xff]
    %v244 = vld [vmem:[#allocation3 + $0x638] sm:$0xff]
    %v245 = vld [vmem:[#allocation3 + $0x640] sm:$0xff]
    %v246 = vld [vmem:[#allocation3 + $0x648] sm:$0xff]
    %v247 = vld [vmem:[#allocation3 + $0x650] sm:$0xff]
    %v248 = vld [vmem:[#allocation3 + $0x658] sm:$0xff]
    %v249 = vld [vmem:[#allocation3 + $0x660] sm:$0xff]
    %v250 = vld [vmem:[#allocation3 + $0x668] sm:$0xff]
    %v251 = vld [vmem:[#allocation3 + $0x670] sm:$0xff]
    %v252 = vld [vmem:[#allocation3 + $0x678] sm:$0xff]
    %v253 = vld [vmem:[#allocation3 + $0x680] sm:$0xff]
    %v254 = vld [vmem:[#allocation3 + $0x688] sm:$0xff]
    %v255 = vld [vmem:[#allocation3 + $0x690] sm:$0xff]
    %v256 = vld [vmem:[#allocation3 + $0x698] sm:$0xff]
    %v257 = vld [vmem:[#allocation3 + $0x6a0] sm:$0xff]
    %v258 = vld [vmem:[#allocation3 + $0x6a8] sm:$0xff]
    %v259 = vld [vmem:[#allocation3 + $0x6b0] sm:$0xff]
    %v260 = vld [vmem:[#allocation3 + $0x6b8] sm:$0xff]
    %v261 = vld [vmem:[#allocation3 + $0x6c0] sm:$0xff]
    %v262 = vld [vmem:[#allocation3 + $0x6c8] sm:$0xff]
    %v263 = vld [vmem:[#allocation3 + $0x6d0] sm:$0xff]
    %v264 = vld [vmem:[#allocation3 + $0x6d8] sm:$0xff]
    %v265 = vld [vmem:[#allocation3 + $0x6e0] sm:$0xff]
    %v266 = vld [vmem:[#allocation3 + $0x6e8] sm:$0xff]
    %v267 = vld [vmem:[#allocation3 + $0x6f0] sm:$0xff]
    %v268 = vld [vmem:[#allocation3 + $0x6f8] sm:$0xff]
    %v269 = vld [vmem:[#allocation3 + $0x700] sm:$0xff]
    %v270 = vld [vmem:[#allocation3 + $0x708] sm:$0xff]
    %v271 = vld [vmem:[#allocation3 + $0x710] sm:$0xff]
    %v272 = vld [vmem:[#allocation3 + $0x718] sm:$0xff]
    %v273 = vld [vmem:[#allocation3 + $0x720] sm:$0xff]
    %v274 = vld [vmem:[#allocation3 + $0x728] sm:$0xff]
    %v275 = vld [vmem:[#allocation3 + $0x730] sm:$0xff]
    %v276 = vld [vmem:[#allocation3 + $0x738] sm:$0xff]
    %v277 = vld [vmem:[#allocation3 + $0x740] sm:$0xff]
    %v278 = vld [vmem:[#allocation3 + $0x748] sm:$0xff]
    %v279 = vld [vmem:[#allocation3 + $0x750] sm:$0xff]
    %v280 = vld [vmem:[#allocation3 + $0x758] sm:$0xff]
    %v281 = vld [vmem:[#allocation3 + $0x760] sm:$0xff]
    %v282 = vld [vmem:[#allocation3 + $0x768] sm:$0xff]
    %v283 = vld [vmem:[#allocation3 + $0x770] sm:$0xff]
    %v284 = vld [vmem:[#allocation3 + $0x778] sm:$0xff]
    %v285 = vld [vmem:[#allocation3 + $0x780] sm:$0xff]
    %v286 = vld [vmem:[#allocation3 + $0x788] sm:$0xff]
    %v287 = vld [vmem:[#allocation3 + $0x790] sm:$0xff]
    %v288 = vld [vmem:[#allocation3 + $0x798] sm:$0xff]
    %v289 = vld [vmem:[#allocation3 + $0x7a0] sm:$0xff]
    %v290 = vld [vmem:[#allocation3 + $0x7a8] sm:$0xff]
    %v291 = vld [vmem:[#allocation3 + $0x7b0] sm:$0xff]
    %v292 = vld [vmem:[#allocation3 + $0x7b8] sm:$0xff]
    %v293 = vld [vmem:[#allocation3 + $0x7c0] sm:$0xff]
    %v294 = vld [vmem:[#allocation3 + $0x7c8] sm:$0xff]
    %v295 = vld [vmem:[#allocation3 + $0x7d0] sm:$0xff]
    %v296 = vld [vmem:[#allocation3 + $0x7d8] sm:$0xff]
    %v297 = vld [vmem:[#allocation3 + $0x7e0] sm:$0xff]
    %v298 = vld [vmem:[#allocation3 + $0x7e8] sm:$0xff]
    %v299 = vld [vmem:[#allocation3 + $0x7f0] sm:$0xff]
    %v300 = vld [vmem:[#allocation3 + $0x7f8] sm:$0xff]
    %v301 = vstv %s44
    %v302 = vmul.f32 %v301, %v45
    %v303 = vmul.f32 %v301, %v46
    %v304 = vmul.f32 %v301, %v47
    %v305 = vmul.f32 %v301, %v48
    %v306 = vmul.f32 %v301, %v49
    %v307 = vmul.f32 %v301, %v50
    %v308 = vmul.f32 %v301, %v51
    %v309 = vmul.f32 %v301, %v52
    %v310 = vmul.f32 %v301, %v53
    %v311 = vmul.f32 %v301, %v54
    %v312 = vmul.f32 %v301, %v55
    %v313 = vmul.f32 %v301, %v56
    %v314 = vmul.f32 %v301, %v57
    %v315 = vmul.f32 %v301, %v58
    %v316 = vmul.f32 %v301, %v59
    %v317 = vmul.f32 %v301, %v60
    %v318 = vmul.f32 %v301, %v61
    %v319 = vmul.f32 %v301, %v62
    %v320 = vmul.f32 %v301, %v63
    %v321 = vmul.f32 %v301, %v64
    %v322 = vmul.f32 %v301, %v65
    %v323 = vmul.f32 %v301, %v66
    %v324 = vmul.f32 %v301, %v67
    %v325 = vmul.f32 %v301, %v68
    %v326 = vmul.f32 %v301, %v69
    %v327 = vmul.f32 %v301, %v70
    %v328 = vmul.f32 %v301, %v71
    %v329 = vmul.f32 %v301, %v72
    %v330 = vmul.f32 %v301, %v73
    %v331 = vmul.f32 %v301, %v74
    %v332 = vmul.f32 %v301, %v75
    %v333 = vmul.f32 %v301, %v76
    %v334 = vmul.f32 %v301, %v77
    %v335 = vmul.f32 %v301, %v78
    %v336 = vmul.f32 %v301, %v79
    %v337 = vmul.f32 %v301, %v80
    %v338 = vmul.f32 %v301, %v81
    %v339 = vmul.f32 %v301, %v82
    %v340 = vmul.f32 %v301, %v83
    %v341 = vmul.f32 %v301, %v84
    %v342 = vmul.f32 %v301, %v85
    %v343 = vmul.f32 %v301, %v86
    %v344 = vmul.f32 %v301, %v87
    %v345 = vmul.f32 %v301, %v88
    %v346 = vmul.f32 %v301, %v89
    %v347 = vmul.f32 %v301, %v90
    %v348 = vmul.f32 %v301, %v91
    %v349 = vmul.f32 %v301, %v92
    %v350 = vmul.f32 %v301, %v93
    %v351 = vmul.f32 %v301, %v94
    %v352 = vmul.f32 %v301, %v95
    %v353 = vmul.f32 %v301, %v96
    %v354 = vmul.f32 %v301, %v97
    %v355 = vmul.f32 %v301, %v98
    %v356 = vmul.f32 %v301, %v99
    %v357 = vmul.f32 %v301, %v100
    %v358 = vmul.f32 %v301, %v101
    %v359 = vmul.f32 %v301, %v102
    %v360 = vmul.f32 %v301, %v103
    %v361 = vmul.f32 %v301, %v104
    %v362 = vmul.f32 %v301, %v105
    %v363 = vmul.f32 %v301, %v106
    %v364 = vmul.f32 %v301, %v107
    %v365 = vmul.f32 %v301, %v108
    %v366 = vmul.f32 %v301, %v109
    %v367 = vmul.f32 %v301, %v110
    %v368 = vmul.f32 %v301, %v111
    %v369 = vmul.f32 %v301, %v112
    %v370 = vmul.f32 %v301, %v113
    %v371 = vmul.f32 %v301, %v114
    %v372 = vmul.f32 %v301, %v115
    %v373 = vmul.f32 %v301, %v116
    %v374 = vmul.f32 %v301, %v117
    %v375 = vmul.f32 %v301, %v118
    %v376 = vmul.f32 %v301, %v119
    %v377 = vmul.f32 %v301, %v120
    %v378 = vmul.f32 %v301, %v121
    %v379 = vmul.f32 %v301, %v122
    %v380 = vmul.f32 %v301, %v123
    %v381 = vmul.f32 %v301, %v124
    %v382 = vmul.f32 %v301, %v125
    %v383 = vmul.f32 %v301, %v126
    %v384 = vmul.f32 %v301, %v127
    %v385 = vmul.f32 %v301, %v128
    %v386 = vmul.f32 %v301, %v129
    %v387 = vmul.f32 %v301, %v130
    %v388 = vmul.f32 %v301, %v131
    %v389 = vmul.f32 %v301, %v132
    %v390 = vmul.f32 %v301, %v133
    %v391 = vmul.f32 %v301, %v134
    %v392 = vmul.f32 %v301, %v135
    %v393 = vmul.f32 %v301, %v136
    %v394 = vmul.f32 %v301, %v137
    %v395 = vmul.f32 %v301, %v138
    %v396 = vmul.f32 %v301, %v139
    %v397 = vmul.f32 %v301, %v140
    %v398 = vmul.f32 %v301, %v141
    %v399 = vmul.f32 %v301, %v142
    %v400 = vmul.f32 %v301, %v143
    %v401 = vmul.f32 %v301, %v144
    %v402 = vmul.f32 %v301, %v145
    %v403 = vmul.f32 %v301, %v146
    %v404 = vmul.f32 %v301, %v147
    %v405 = vmul.f32 %v301, %v148
    %v406 = vmul.f32 %v301, %v149
    %v407 = vmul.f32 %v301, %v150
    %v408 = vmul.f32 %v301, %v151
    %v409 = vmul.f32 %v301, %v152
    %v410 = vmul.f32 %v301, %v153
    %v411 = vmul.f32 %v301, %v154
    %v412 = vmul.f32 %v301, %v155
    %v413 = vmul.f32 %v301, %v156
    %v414 = vmul.f32 %v301, %v157
    %v415 = vmul.f32 %v301, %v158
    %v416 = vmul.f32 %v301, %v159
    %v417 = vmul.f32 %v301, %v160
    %v418 = vmul.f32 %v301, %v161
    %v419 = vmul.f32 %v301, %v162
    %v420 = vmul.f32 %v301, %v163
    %v421 = vmul.f32 %v301, %v164
    %v422 = vmul.f32 %v301, %v165
    %v423 = vmul.f32 %v301, %v166
    %v424 = vmul.f32 %v301, %v167
    %v425 = vmul.f32 %v301, %v168
    %v426 = vmul.f32 %v301, %v169
    %v427 = vmul.f32 %v301, %v170
    %v428 = vmul.f32 %v301, %v171
    %v429 = vmul.f32 %v301, %v172
    %v430 = vmul.f32 %v301, %v173
    %v431 = vmul.f32 %v301, %v174
    %v432 = vmul.f32 %v301, %v175
    %v433 = vmul.f32 %v301, %v176
    %v434 = vmul.f32 %v301, %v177
    %v435 = vmul.f32 %v301, %v178
    %v436 = vmul.f32 %v301, %v179
    %v437 = vmul.f32 %v301, %v180
    %v438 = vmul.f32 %v301, %v181
    %v439 = vmul.f32 %v301, %v182
    %v440 = vmul.f32 %v301, %v183
    %v441 = vmul.f32 %v301, %v184
    %v442 = vmul.f32 %v301, %v185
    %v443 = vmul.f32 %v301, %v186
    %v444 = vmul.f32 %v301, %v187
    %v445 = vmul.f32 %v301, %v188
    %v446 = vmul.f32 %v301, %v189
    %v447 = vmul.f32 %v301, %v190
    %v448 = vmul.f32 %v301, %v191
    %v449 = vmul.f32 %v301, %v192
    %v450 = vmul.f32 %v301, %v193
    %v451 = vmul.f32 %v301, %v194
    %v452 = vmul.f32 %v301, %v195
    %v453 = vmul.f32 %v301, %v196
    %v454 = vmul.f32 %v301, %v197
    %v455 = vmul.f32 %v301, %v198
    %v456 = vmul.f32 %v301, %v199
    %v457 = vmul.f32 %v301, %v200
    %v458 = vmul.f32 %v301, %v201
    %v459 = vmul.f32 %v301, %v202
    %v460 = vmul.f32 %v301, %v203
    %v461 = vmul.f32 %v301, %v204
    %v462 = vmul.f32 %v301, %v205
    %v463 = vmul.f32 %v301, %v206
    %v464 = vmul.f32 %v301, %v207
    %v465 = vmul.f32 %v301, %v208
    %v466 = vmul.f32 %v301, %v209
    %v467 = vmul.f32 %v301, %v210
    %v468 = vmul.f32 %v301, %v211
    %v469 = vmul.f32 %v301, %v212
    %v470 = vmul.f32 %v301, %v213
    %v471 = vmul.f32 %v301, %v214
    %v472 = vmul.f32 %v301, %v215
    %v473 = vmul.f32 %v301, %v216
    %v474 = vmul.f32 %v301, %v217
    %v475 = vmul.f32 %v301, %v218
    %v476 = vmul.f32 %v301, %v219
    %v477 = vmul.f32 %v301, %v220
    %v478 = vmul.f32 %v301, %v221
    %v479 = vmul.f32 %v301, %v222
    %v480 = vmul.f32 %v301, %v223
    %v481 = vmul.f32 %v301, %v224
    %v482 = vmul.f32 %v301, %v225
    %v483 = vmul.f32 %v301, %v226
    %v484 = vmul.f32 %v301, %v227
    %v485 = vmul.f32 %v301, %v228
    %v486 = vmul.f32 %v301, %v229
    %v487 = vmul.f32 %v301, %v230
    %v488 = vmul.f32 %v301, %v231
    %v489 = vmul.f32 %v301, %v232
    %v490 = vmul.f32 %v301, %v233
    %v491 = vmul.f32 %v301, %v234
    %v492 = vmul.f32 %v301, %v235
    %v493 = vmul.f32 %v301, %v236
    %v494 = vmul.f32 %v301, %v237
    %v495 = vmul.f32 %v301, %v238
    %v496 = vmul.f32 %v301, %v239
    %v497 = vmul.f32 %v301, %v240
    %v498 = vmul.f32 %v301, %v241
    %v499 = vmul.f32 %v301, %v242
    %v500 = vmul.f32 %v301, %v243
    %v501 = vmul.f32 %v301, %v244
    %v502 = vmul.f32 %v301, %v245
    %v503 = vmul.f32 %v301, %v246
    %v504 = vmul.f32 %v301, %v247
    %v505 = vmul.f32 %v301, %v248
    %v506 = vmul.f32 %v301, %v249
    %v507 = vmul.f32 %v301, %v250
    %v508 = vmul.f32 %v301, %v251
    %v509 = vmul.f32 %v301, %v252
    %v510 = vmul.f32 %v301, %v253
    %v511 = vmul.f32 %v301, %v254
    %v512 = vmul.f32 %v301, %v255
    %v513 = vmul.f32 %v301, %v256
    %v514 = vmul.f32 %v301, %v257
    %v515 = vmul.f32 %v301, %v258
    %v516 = vmul.f32 %v301, %v259
    %v517 = vmul.f32 %v301, %v260
    %v518 = vmul.f32 %v301, %v261
    %v519 = vmul.f32 %v301, %v262
    %v520 = vmul.f32 %v301, %v263
    %v521 = vmul.f32 %v301, %v264
    %v522 = vmul.f32 %v301, %v265
    %v523 = vmul.f32 %v301, %v266
    %v524 = vmul.f32 %v301, %v267
    %v525 = vmul.f32 %v301, %v268
    %v526 = vmul.f32 %v301, %v269
    %v527 = vmul.f32 %v301, %v270
    %v528 = vmul.f32 %v301, %v271
    %v529 = vmul.f32 %v301, %v272
    %v530 = vmul.f32 %v301, %v273
    %v531 = vmul.f32 %v301, %v274
    %v532 = vmul.f32 %v301, %v275
    %v533 = vmul.f32 %v301, %v276
    %v534 = vmul.f32 %v301, %v277
    %v535 = vmul.f32 %v301, %v278
    %v536 = vmul.f32 %v301, %v279
    %v537 = vmul.f32 %v301, %v280
    %v538 = vmul.f32 %v301, %v281
    %v539 = vmul.f32 %v301, %v282
    %v540 = vmul.f32 %v301, %v283
    %v541 = vmul.f32 %v301, %v284
    %v542 = vmul.f32 %v301, %v285
    %v543 = vmul.f32 %v301, %v286
    %v544 = vmul.f32 %v301, %v287
    %v545 = vmul.f32 %v301, %v288
    %v546 = vmul.f32 %v301, %v289
    %v547 = vmul.f32 %v301, %v290
    %v548 = vmul.f32 %v301, %v291
    %v549 = vmul.f32 %v301, %v292
    %v550 = vmul.f32 %v301, %v293
    %v551 = vmul.f32 %v301, %v294
    %v552 = vmul.f32 %v301, %v295
    %v553 = vmul.f32 %v301, %v296
    %v554 = vmul.f32 %v301, %v297
    %v555 = vmul.f32 %v301, %v298
    %v556 = vmul.f32 %v301, %v299
    %v557 = vmul.f32 %v301, %v300
    %s558 = ssub.f32 1.0, %s44
    %v559 = vld [vmem:[#allocation6] sm:$0xff]
    %v560 = vld [vmem:[#allocation6 + $0x8] sm:$0xff]
    %v561 = vld [vmem:[#allocation6 + $0x10] sm:$0xff]
    %v562 = vld [vmem:[#allocation6 + $0x18] sm:$0xff]
    %v563 = vld [vmem:[#allocation6 + $0x20] sm:$0xff]
    %v564 = vld [vmem:[#allocation6 + $0x28] sm:$0xff]
    %v565 = vld [vmem:[#allocation6 + $0x30] sm:$0xff]
    %v566 = vld [vmem:[#allocation6 + $0x38] sm:$0xff]
    %v567 = vld [vmem:[#allocation6 + $0x40] sm:$0xff]
    %v568 = vld [vmem:[#allocation6 + $0x48] sm:$0xff]
    %v569 = vld [vmem:[#allocation6 + $0x50] sm:$0xff]
    %v570 = vld [vmem:[#allocation6 + $0x58] sm:$0xff]
    %v571 = vld [vmem:[#allocation6 + $0x60] sm:$0xff]
    %v572 = vld [vmem:[#allocation6 + $0x68] sm:$0xff]
    %v573 = vld [vmem:[#allocation6 + $0x70] sm:$0xff]
    %v574 = vld [vmem:[#allocation6 + $0x78] sm:$0xff]
    %v575 = vld [vmem:[#allocation6 + $0x80] sm:$0xff]
    %v576 = vld [vmem:[#allocation6 + $0x88] sm:$0xff]
    %v577 = vld [vmem:[#allocation6 + $0x90] sm:$0xff]
    %v578 = vld [vmem:[#allocation6 + $0x98] sm:$0xff]
    %v579 = vld [vmem:[#allocation6 + $0xa0] sm:$0xff]
    %v580 = vld [vmem:[#allocation6 + $0xa8] sm:$0xff]
    %v581 = vld [vmem:[#allocation6 + $0xb0] sm:$0xff]
    %v582 = vld [vmem:[#allocation6 + $0xb8] sm:$0xff]
    %v583 = vld [vmem:[#allocation6 + $0xc0] sm:$0xff]
    %v584 = vld [vmem:[#allocation6 + $0xc8] sm:$0xff]
    %v585 = vld [vmem:[#allocation6 + $0xd0] sm:$0xff]
    %v586 = vld [vmem:[#allocation6 + $0xd8] sm:$0xff]
    %v587 = vld [vmem:[#allocation6 + $0xe0] sm:$0xff]
    %v588 = vld [vmem:[#allocation6 + $0xe8] sm:$0xff]
    %v589 = vld [vmem:[#allocation6 + $0xf0] sm:$0xff]
    %v590 = vld [vmem:[#allocation6 + $0xf8] sm:$0xff]
    %v591 = vld [vmem:[#allocation6 + $0x100] sm:$0xff]
    %v592 = vld [vmem:[#allocation6 + $0x108] sm:$0xff]
    %v593 = vld [vmem:[#allocation6 + $0x110] sm:$0xff]
    %v594 = vld [vmem:[#allocation6 + $0x118] sm:$0xff]
    %v595 = vld [vmem:[#allocation6 + $0x120] sm:$0xff]
    %v596 = vld [vmem:[#allocation6 + $0x128] sm:$0xff]
    %v597 = vld [vmem:[#allocation6 + $0x130] sm:$0xff]
    %v598 = vld [vmem:[#allocation6 + $0x138] sm:$0xff]
    %v599 = vld [vmem:[#allocation6 + $0x140] sm:$0xff]
    %v600 = vld [vmem:[#allocation6 + $0x148] sm:$0xff]
    %v601 = vld [vmem:[#allocation6 + $0x150] sm:$0xff]
    %v602 = vld [vmem:[#allocation6 + $0x158] sm:$0xff]
    %v603 = vld [vmem:[#allocation6 + $0x160] sm:$0xff]
    %v604 = vld [vmem:[#allocation6 + $0x168] sm:$0xff]
    %v605 = vld [vmem:[#allocation6 + $0x170] sm:$0xff]
    %v606 = vld [vmem:[#allocation6 + $0x178] sm:$0xff]
    %v607 = vld [vmem:[#allocation6 + $0x180] sm:$0xff]
    %v608 = vld [vmem:[#allocation6 + $0x188] sm:$0xff]
    %v609 = vld [vmem:[#allocation6 + $0x190] sm:$0xff]
    %v610 = vld [vmem:[#allocation6 + $0x198] sm:$0xff]
    %v611 = vld [vmem:[#allocation6 + $0x1a0] sm:$0xff]
    %v612 = vld [vmem:[#allocation6 + $0x1a8] sm:$0xff]
    %v613 = vld [vmem:[#allocation6 + $0x1b0] sm:$0xff]
    %v614 = vld [vmem:[#allocation6 + $0x1b8] sm:$0xff]
    %v615 = vld [vmem:[#allocation6 + $0x1c0] sm:$0xff]
    %v616 = vld [vmem:[#allocation6 + $0x1c8] sm:$0xff]
    %v617 = vld [vmem:[#allocation6 + $0x1d0] sm:$0xff]
    %v618 = vld [vmem:[#allocation6 + $0x1d8] sm:$0xff]
    %v619 = vld [vmem:[#allocation6 + $0x1e0] sm:$0xff]
    %v620 = vld [vmem:[#allocation6 + $0x1e8] sm:$0xff]
    %v621 = vld [vmem:[#allocation6 + $0x1f0] sm:$0xff]
    %v622 = vld [vmem:[#allocation6 + $0x1f8] sm:$0xff]
    %v623 = vld [vmem:[#allocation6 + $0x200] sm:$0xff]
    %v624 = vld [vmem:[#allocation6 + $0x208] sm:$0xff]
    %v625 = vld [vmem:[#allocation6 + $0x210] sm:$0xff]
    %v626 = vld [vmem:[#allocation6 + $0x218] sm:$0xff]
    %v627 = vld [vmem:[#allocation6 + $0x220] sm:$0xff]
    %v628 = vld [vmem:[#allocation6 + $0x228] sm:$0xff]
    %v629 = vld [vmem:[#allocation6 + $0x230] sm:$0xff]
    %v630 = vld [vmem:[#allocation6 + $0x238] sm:$0xff]
    %v631 = vld [vmem:[#allocation6 + $0x240] sm:$0xff]
    %v632 = vld [vmem:[#allocation6 + $0x248] sm:$0xff]
    %v633 = vld [vmem:[#allocation6 + $0x250] sm:$0xff]
    %v634 = vld [vmem:[#allocation6 + $0x258] sm:$0xff]
    %v635 = vld [vmem:[#allocation6 + $0x260] sm:$0xff]
    %v636 = vld [vmem:[#allocation6 + $0x268] sm:$0xff]
    %v637 = vld [vmem:[#allocation6 + $0x270] sm:$0xff]
    %v638 = vld [vmem:[#allocation6 + $0x278] sm:$0xff]
    %v639 = vld [vmem:[#allocation6 + $0x280] sm:$0xff]
    %v640 = vld [vmem:[#allocation6 + $0x288] sm:$0xff]
    %v641 = vld [vmem:[#allocation6 + $0x290] sm:$0xff]
    %v642 = vld [vmem:[#allocation6 + $0x298] sm:$0xff]
    %v643 = vld [vmem:[#allocation6 + $0x2a0] sm:$0xff]
    %v644 = vld [vmem:[#allocation6 + $0x2a8] sm:$0xff]
    %v645 = vld [vmem:[#allocation6 + $0x2b0] sm:$0xff]
    %v646 = vld [vmem:[#allocation6 + $0x2b8] sm:$0xff]
    %v647 = vld [vmem:[#allocation6 + $0x2c0] sm:$0xff]
    %v648 = vld [vmem:[#allocation6 + $0x2c8] sm:$0xff]
    %v649 = vld [vmem:[#allocation6 + $0x2d0] sm:$0xff]
    %v650 = vld [vmem:[#allocation6 + $0x2d8] sm:$0xff]
    %v651 = vld [vmem:[#allocation6 + $0x2e0] sm:$0xff]
    %v652 = vld [vmem:[#allocation6 + $0x2e8] sm:$0xff]
    %v653 = vld [vmem:[#allocation6 + $0x2f0] sm:$0xff]
    %v654 = vld [vmem:[#allocation6 + $0x2f8] sm:$0xff]
    %v655 = vld [vmem:[#allocation6 + $0x300] sm:$0xff]
    %v656 = vld [vmem:[#allocation6 + $0x308] sm:$0xff]
    %v657 = vld [vmem:[#allocation6 + $0x310] sm:$0xff]
    %v658 = vld [vmem:[#allocation6 + $0x318] sm:$0xff]
    %v659 = vld [vmem:[#allocation6 + $0x320] sm:$0xff]
    %v660 = vld [vmem:[#allocation6 + $0x328] sm:$0xff]
    %v661 = vld [vmem:[#allocation6 + $0x330] sm:$0xff]
    %v662 = vld [vmem:[#allocation6 + $0x338] sm:$0xff]
    %v663 = vld [vmem:[#allocation6 + $0x340] sm:$0xff]
    %v664 = vld [vmem:[#allocation6 + $0x348] sm:$0xff]
    %v665 = vld [vmem:[#allocation6 + $0x350] sm:$0xff]
    %v666 = vld [vmem:[#allocation6 + $0x358] sm:$0xff]
    %v667 = vld [vmem:[#allocation6 + $0x360] sm:$0xff]
    %v668 = vld [vmem:[#allocation6 + $0x368] sm:$0xff]
    %v669 = vld [vmem:[#allocation6 + $0x370] sm:$0xff]
    %v670 = vld [vmem:[#allocation6 + $0x378] sm:$0xff]
    %v671 = vld [vmem:[#allocation6 + $0x380] sm:$0xff]
    %v672 = vld [vmem:[#allocation6 + $0x388] sm:$0xff]
    %v673 = vld [vmem:[#allocation6 + $0x390] sm:$0xff]
    %v674 = vld [vmem:[#allocation6 + $0x398] sm:$0xff]
    %v675 = vld [vmem:[#allocation6 + $0x3a0] sm:$0xff]
    %v676 = vld [vmem:[#allocation6 + $0x3a8] sm:$0xff]
    %v677 = vld [vmem:[#allocation6 + $0x3b0] sm:$0xff]
    %v678 = vld [vmem:[#allocation6 + $0x3b8] sm:$0xff]
    %v679 = vld [vmem:[#allocation6 + $0x3c0] sm:$0xff]
    %v680 = vld [vmem:[#allocation6 + $0x3c8] sm:$0xff]
    %v681 = vld [vmem:[#allocation6 + $0x3d0] sm:$0xff]
    %v682 = vld [vmem:[#allocation6 + $0x3d8] sm:$0xff]
    %v683 = vld [vmem:[#allocation6 + $0x3e0] sm:$0xff]
    %v684 = vld [vmem:[#allocation6 + $0x3e8] sm:$0xff]
    %v685 = vld [vmem:[#allocation6 + $0x3f0] sm:$0xff]
    %v686 = vld [vmem:[#allocation6 + $0x3f8] sm:$0xff]
    %v687 = vld [vmem:[#allocation6 + $0x400] sm:$0xff]
    %v688 = vld [vmem:[#allocation6 + $0x408] sm:$0xff]
    %v689 = vld [vmem:[#allocation6 + $0x410] sm:$0xff]
    %v690 = vld [vmem:[#allocation6 + $0x418] sm:$0xff]
    %v691 = vld [vmem:[#allocation6 + $0x420] sm:$0xff]
    %v692 = vld [vmem:[#allocation6 + $0x428] sm:$0xff]
    %v693 = vld [vmem:[#allocation6 + $0x430] sm:$0xff]
    %v694 = vld [vmem:[#allocation6 + $0x438] sm:$0xff]
    %v695 = vld [vmem:[#allocation6 + $0x440] sm:$0xff]
    %v696 = vld [vmem:[#allocation6 + $0x448] sm:$0xff]
    %v697 = vld [vmem:[#allocation6 + $0x450] sm:$0xff]
    %v698 = vld [vmem:[#allocation6 + $0x458] sm:$0xff]
    %v699 = vld [vmem:[#allocation6 + $0x460] sm:$0xff]
    %v700 = vld [vmem:[#allocation6 + $0x468] sm:$0xff]
    %v701 = vld [vmem:[#allocation6 + $0x470] sm:$0xff]
    %v702 = vld [vmem:[#allocation6 + $0x478] sm:$0xff]
    %v703 = vld [vmem:[#allocation6 + $0x480] sm:$0xff]
    %v704 = vld [vmem:[#allocation6 + $0x488] sm:$0xff]
    %v705 = vld [vmem:[#allocation6 + $0x490] sm:$0xff]
    %v706 = vld [vmem:[#allocation6 + $0x498] sm:$0xff]
    %v707 = vld [vmem:[#allocation6 + $0x4a0] sm:$0xff]
    %v708 = vld [vmem:[#allocation6 + $0x4a8] sm:$0xff]
    %v709 = vld [vmem:[#allocation6 + $0x4b0] sm:$0xff]
    %v710 = vld [vmem:[#allocation6 + $0x4b8] sm:$0xff]
    %v711 = vld [vmem:[#allocation6 + $0x4c0] sm:$0xff]
    %v712 = vld [vmem:[#allocation6 + $0x4c8] sm:$0xff]
    %v713 = vld [vmem:[#allocation6 + $0x4d0] sm:$0xff]
    %v714 = vld [vmem:[#allocation6 + $0x4d8] sm:$0xff]
    %v715 = vld [vmem:[#allocation6 + $0x4e0] sm:$0xff]
    %v716 = vld [vmem:[#allocation6 + $0x4e8] sm:$0xff]
    %v717 = vld [vmem:[#allocation6 + $0x4f0] sm:$0xff]
    %v718 = vld [vmem:[#allocation6 + $0x4f8] sm:$0xff]
    %v719 = vld [vmem:[#allocation6 + $0x500] sm:$0xff]
    %v720 = vld [vmem:[#allocation6 + $0x508] sm:$0xff]
    %v721 = vld [vmem:[#allocation6 + $0x510] sm:$0xff]
    %v722 = vld [vmem:[#allocation6 + $0x518] sm:$0xff]
    %v723 = vld [vmem:[#allocation6 + $0x520] sm:$0xff]
    %v724 = vld [vmem:[#allocation6 + $0x528] sm:$0xff]
    %v725 = vld [vmem:[#allocation6 + $0x530] sm:$0xff]
    %v726 = vld [vmem:[#allocation6 + $0x538] sm:$0xff]
    %v727 = vld [vmem:[#allocation6 + $0x540] sm:$0xff]
    %v728 = vld [vmem:[#allocation6 + $0x548] sm:$0xff]
    %v729 = vld [vmem:[#allocation6 + $0x550] sm:$0xff]
    %v730 = vld [vmem:[#allocation6 + $0x558] sm:$0xff]
    %v731 = vld [vmem:[#allocation6 + $0x560] sm:$0xff]
    %v732 = vld [vmem:[#allocation6 + $0x568] sm:$0xff]
    %v733 = vld [vmem:[#allocation6 + $0x570] sm:$0xff]
    %v734 = vld [vmem:[#allocation6 + $0x578] sm:$0xff]
    %v735 = vld [vmem:[#allocation6 + $0x580] sm:$0xff]
    %v736 = vld [vmem:[#allocation6 + $0x588] sm:$0xff]
    %v737 = vld [vmem:[#allocation6 + $0x590] sm:$0xff]
    %v738 = vld [vmem:[#allocation6 + $0x598] sm:$0xff]
    %v739 = vld [vmem:[#allocation6 + $0x5a0] sm:$0xff]
    %v740 = vld [vmem:[#allocation6 + $0x5a8] sm:$0xff]
    %v741 = vld [vmem:[#allocation6 + $0x5b0] sm:$0xff]
    %v742 = vld [vmem:[#allocation6 + $0x5b8] sm:$0xff]
    %v743 = vld [vmem:[#allocation6 + $0x5c0] sm:$0xff]
    %v744 = vld [vmem:[#allocation6 + $0x5c8] sm:$0xff]
    %v745 = vld [vmem:[#allocation6 + $0x5d0] sm:$0xff]
    %v746 = vld [vmem:[#allocation6 + $0x5d8] sm:$0xff]
    %v747 = vld [vmem:[#allocation6 + $0x5e0] sm:$0xff]
    %v748 = vld [vmem:[#allocation6 + $0x5e8] sm:$0xff]
    %v749 = vld [vmem:[#allocation6 + $0x5f0] sm:$0xff]
    %v750 = vld [vmem:[#allocation6 + $0x5f8] sm:$0xff]
    %v751 = vld [vmem:[#allocation6 + $0x600] sm:$0xff]
    %v752 = vld [vmem:[#allocation6 + $0x608] sm:$0xff]
    %v753 = vld [vmem:[#allocation6 + $0x610] sm:$0xff]
    %v754 = vld [vmem:[#allocation6 + $0x618] sm:$0xff]
    %v755 = vld [vmem:[#allocation6 + $0x620] sm:$0xff]
    %v756 = vld [vmem:[#allocation6 + $0x628] sm:$0xff]
    %v757 = vld [vmem:[#allocation6 + $0x630] sm:$0xff]
    %v758 = vld [vmem:[#allocation6 + $0x638] sm:$0xff]
    %v759 = vld [vmem:[#allocation6 + $0x640] sm:$0xff]
    %v760 = vld [vmem:[#allocation6 + $0x648] sm:$0xff]
    %v761 = vld [vmem:[#allocation6 + $0x650] sm:$0xff]
    %v762 = vld [vmem:[#allocation6 + $0x658] sm:$0xff]
    %v763 = vld [vmem:[#allocation6 + $0x660] sm:$0xff]
    %v764 = vld [vmem:[#allocation6 + $0x668] sm:$0xff]
    %v765 = vld [vmem:[#allocation6 + $0x670] sm:$0xff]
    %v766 = vld [vmem:[#allocation6 + $0x678] sm:$0xff]
    %v767 = vld [vmem:[#allocation6 + $0x680] sm:$0xff]
    %v768 = vld [vmem:[#allocation6 + $0x688] sm:$0xff]
    %v769 = vld [vmem:[#allocation6 + $0x690] sm:$0xff]
    %v770 = vld [vmem:[#allocation6 + $0x698] sm:$0xff]
    %v771 = vld [vmem:[#allocation6 + $0x6a0] sm:$0xff]
    %v772 = vld [vmem:[#allocation6 + $0x6a8] sm:$0xff]
    %v773 = vld [vmem:[#allocation6 + $0x6b0] sm:$0xff]
    %v774 = vld [vmem:[#allocation6 + $0x6b8] sm:$0xff]
    %v775 = vld [vmem:[#allocation6 + $0x6c0] sm:$0xff]
    %v776 = vld [vmem:[#allocation6 + $0x6c8] sm:$0xff]
    %v777 = vld [vmem:[#allocation6 + $0x6d0] sm:$0xff]
    %v778 = vld [vmem:[#allocation6 + $0x6d8] sm:$0xff]
    %v779 = vld [vmem:[#allocation6 + $0x6e0] sm:$0xff]
    %v780 = vld [vmem:[#allocation6 + $0x6e8] sm:$0xff]
    %v781 = vld [vmem:[#allocation6 + $0x6f0] sm:$0xff]
    %v782 = vld [vmem:[#allocation6 + $0x6f8] sm:$0xff]
    %v783 = vld [vmem:[#allocation6 + $0x700] sm:$0xff]
    %v784 = vld [vmem:[#allocation6 + $0x708] sm:$0xff]
    %v785 = vld [vmem:[#allocation6 + $0x710] sm:$0xff]
    %v786 = vld [vmem:[#allocation6 + $0x718] sm:$0xff]
    %v787 = vld [vmem:[#allocation6 + $0x720] sm:$0xff]
    %v788 = vld [vmem:[#allocation6 + $0x728] sm:$0xff]
    %v789 = vld [vmem:[#allocation6 + $0x730] sm:$0xff]
    %v790 = vld [vmem:[#allocation6 + $0x738] sm:$0xff]
    %v791 = vld [vmem:[#allocation6 + $0x740] sm:$0xff]
    %v792 = vld [vmem:[#allocation6 + $0x748] sm:$0xff]
    %v793 = vld [vmem:[#allocation6 + $0x750] sm:$0xff]
    %v794 = vld [vmem:[#allocation6 + $0x758] sm:$0xff]
    %v795 = vld [vmem:[#allocation6 + $0x760] sm:$0xff]
    %v796 = vld [vmem:[#allocation6 + $0x768] sm:$0xff]
    %v797 = vld [vmem:[#allocation6 + $0x770] sm:$0xff]
    %v798 = vld [vmem:[#allocation6 + $0x778] sm:$0xff]
    %v799 = vld [vmem:[#allocation6 + $0x780] sm:$0xff]
    %v800 = vld [vmem:[#allocation6 + $0x788] sm:$0xff]
    %v801 = vld [vmem:[#allocation6 + $0x790] sm:$0xff]
    %v802 = vld [vmem:[#allocation6 + $0x798] sm:$0xff]
    %v803 = vld [vmem:[#allocation6 + $0x7a0] sm:$0xff]
    %v804 = vld [vmem:[#allocation6 + $0x7a8] sm:$0xff]
    %v805 = vld [vmem:[#allocation6 + $0x7b0] sm:$0xff]
    %v806 = vld [vmem:[#allocation6 + $0x7b8] sm:$0xff]
    %v807 = vld [vmem:[#allocation6 + $0x7c0] sm:$0xff]
    %v808 = vld [vmem:[#allocation6 + $0x7c8] sm:$0xff]
    %v809 = vld [vmem:[#allocation6 + $0x7d0] sm:$0xff]
    %v810 = vld [vmem:[#allocation6 + $0x7d8] sm:$0xff]
    %v811 = vld [vmem:[#allocation6 + $0x7e0] sm:$0xff]
    %v812 = vld [vmem:[#allocation6 + $0x7e8] sm:$0xff]
    %v813 = vld [vmem:[#allocation6 + $0x7f0] sm:$0xff]
    %v814 = vld [vmem:[#allocation6 + $0x7f8] sm:$0xff]
    %v815 = vstv %s558
    %v816 = vmul.f32 %v815, %v559
    %v817 = vmul.f32 %v815, %v560
    %v818 = vmul.f32 %v815, %v561
    %v819 = vmul.f32 %v815, %v562
    %v820 = vmul.f32 %v815, %v563
    %v821 = vmul.f32 %v815, %v564
    %v822 = vmul.f32 %v815, %v565
    %v823 = vmul.f32 %v815, %v566
    %v824 = vmul.f32 %v815, %v567
    %v825 = vmul.f32 %v815, %v568
    %v826 = vmul.f32 %v815, %v569
    %v827 = vmul.f32 %v815, %v570
    %v828 = vmul.f32 %v815, %v571
    %v829 = vmul.f32 %v815, %v572
    %v830 = vmul.f32 %v815, %v573
    %v831 = vmul.f32 %v815, %v574
    %v832 = vmul.f32 %v815, %v575
    %v833 = vmul.f32 %v815, %v576
    %v834 = vmul.f32 %v815, %v577
    %v835 = vmul.f32 %v815, %v578
    %v836 = vmul.f32 %v815, %v579
    %v837 = vmul.f32 %v815, %v580
    %v838 = vmul.f32 %v815, %v581
    %v839 = vmul.f32 %v815, %v582
    %v840 = vmul.f32 %v815, %v583
    %v841 = vmul.f32 %v815, %v584
    %v842 = vmul.f32 %v815, %v585
    %v843 = vmul.f32 %v815, %v586
    %v844 = vmul.f32 %v815, %v587
    %v845 = vmul.f32 %v815, %v588
    %v846 = vmul.f32 %v815, %v589
    %v847 = vmul.f32 %v815, %v590
    %v848 = vmul.f32 %v815, %v591
    %v849 = vmul.f32 %v815, %v592
    %v850 = vmul.f32 %v815, %v593
    %v851 = vmul.f32 %v815, %v594
    %v852 = vmul.f32 %v815, %v595
    %v853 = vmul.f32 %v815, %v596
    %v854 = vmul.f32 %v815, %v597
    %v855 = vmul.f32 %v815, %v598
    %v856 = vmul.f32 %v815, %v599
    %v857 = vmul.f32 %v815, %v600
    %v858 = vmul.f32 %v815, %v601
    %v859 = vmul.f32 %v815, %v602
    %v860 = vmul.f32 %v815, %v603
    %v861 = vmul.f32 %v815, %v604
    %v862 = vmul.f32 %v815, %v605
    %v863 = vmul.f32 %v815, %v606
    %v864 = vmul.f32 %v815, %v607
    %v865 = vmul.f32 %v815, %v608
    %v866 = vmul.f32 %v815, %v609
    %v867 = vmul.f32 %v815, %v610
    %v868 = vmul.f32 %v815, %v611
    %v869 = vmul.f32 %v815, %v612
    %v870 = vmul.f32 %v815, %v613
    %v871 = vmul.f32 %v815, %v614
    %v872 = vmul.f32 %v815, %v615
    %v873 = vmul.f32 %v815, %v616
    %v874 = vmul.f32 %v815, %v617
    %v875 = vmul.f32 %v815, %v618
    %v876 = vmul.f32 %v815, %v619
    %v877 = vmul.f32 %v815, %v620
    %v878 = vmul.f32 %v815, %v621
    %v879 = vmul.f32 %v815, %v622
    %v880 = vmul.f32 %v815, %v623
    %v881 = vmul.f32 %v815, %v624
    %v882 = vmul.f32 %v815, %v625
    %v883 = vmul.f32 %v815, %v626
    %v884 = vmul.f32 %v815, %v627
    %v885 = vmul.f32 %v815, %v628
    %v886 = vmul.f32 %v815, %v629
    %v887 = vmul.f32 %v815, %v630
    %v888 = vmul.f32 %v815, %v631
    %v889 = vmul.f32 %v815, %v632
    %v890 = vmul.f32 %v815, %v633
    %v891 = vmul.f32 %v815, %v634
    %v892 = vmul.f32 %v815, %v635
    %v893 = vmul.f32 %v815, %v636
    %v894 = vmul.f32 %v815, %v637
    %v895 = vmul.f32 %v815, %v638
    %v896 = vmul.f32 %v815, %v639
    %v897 = vmul.f32 %v815, %v640
    %v898 = vmul.f32 %v815, %v641
    %v899 = vmul.f32 %v815, %v642
    %v900 = vmul.f32 %v815, %v643
    %v901 = vmul.f32 %v815, %v644
    %v902 = vmul.f32 %v815, %v645
    %v903 = vmul.f32 %v815, %v646
    %v904 = vmul.f32 %v815, %v647
    %v905 = vmul.f32 %v815, %v648
    %v906 = vmul.f32 %v815, %v649
    %v907 = vmul.f32 %v815, %v650
    %v908 = vmul.f32 %v815, %v651
    %v909 = vmul.f32 %v815, %v652
    %v910 = vmul.f32 %v815, %v653
    %v911 = vmul.f32 %v815, %v654
    %v912 = vmul.f32 %v815, %v655
    %v913 = vmul.f32 %v815, %v656
    %v914 = vmul.f32 %v815, %v657
    %v915 = vmul.f32 %v815, %v658
    %v916 = vmul.f32 %v815, %v659
    %v917 = vmul.f32 %v815, %v660
    %v918 = vmul.f32 %v815, %v661
    %v919 = vmul.f32 %v815, %v662
    %v920 = vmul.f32 %v815, %v663
    %v921 = vmul.f32 %v815, %v664
    %v922 = vmul.f32 %v815, %v665
    %v923 = vmul.f32 %v815, %v666
    %v924 = vmul.f32 %v815, %v667
    %v925 = vmul.f32 %v815, %v668
    %v926 = vmul.f32 %v815, %v669
    %v927 = vmul.f32 %v815, %v670
    %v928 = vmul.f32 %v815, %v671
    %v929 = vmul.f32 %v815, %v672
    %v930 = vmul.f32 %v815, %v673
    %v931 = vmul.f32 %v815, %v674
    %v932 = vmul.f32 %v815, %v675
    %v933 = vmul.f32 %v815, %v676
    %v934 = vmul.f32 %v815, %v677
    %v935 = vmul.f32 %v815, %v678
    %v936 = vmul.f32 %v815, %v679
    %v937 = vmul.f32 %v815, %v680
    %v938 = vmul.f32 %v815, %v681
    %v939 = vmul.f32 %v815, %v682
    %v940 = vmul.f32 %v815, %v683
    %v941 = vmul.f32 %v815, %v684
    %v942 = vmul.f32 %v815, %v685
    %v943 = vmul.f32 %v815, %v686
    %v944 = vmul.f32 %v815, %v687
    %v945 = vmul.f32 %v815, %v688
    %v946 = vmul.f32 %v815, %v689
    %v947 = vmul.f32 %v815, %v690
    %v948 = vmul.f32 %v815, %v691
    %v949 = vmul.f32 %v815, %v692
    %v950 = vmul.f32 %v815, %v693
    %v951 = vmul.f32 %v815, %v694
    %v952 = vmul.f32 %v815, %v695
    %v953 = vmul.f32 %v815, %v696
    %v954 = vmul.f32 %v815, %v697
    %v955 = vmul.f32 %v815, %v698
    %v956 = vmul.f32 %v815, %v699
    %v957 = vmul.f32 %v815, %v700
    %v958 = vmul.f32 %v815, %v701
    %v959 = vmul.f32 %v815, %v702
    %v960 = vmul.f32 %v815, %v703
    %v961 = vmul.f32 %v815, %v704
    %v962 = vmul.f32 %v815, %v705
    %v963 = vmul.f32 %v815, %v706
    %v964 = vmul.f32 %v815, %v707
    %v965 = vmul.f32 %v815, %v708
    %v966 = vmul.f32 %v815, %v709
    %v967 = vmul.f32 %v815, %v710
    %v968 = vmul.f32 %v815, %v711
    %v969 = vmul.f32 %v815, %v712
    %v970 = vmul.f32 %v815, %v713
    %v971 = vmul.f32 %v815, %v714
    %v972 = vmul.f32 %v815, %v715
    %v973 = vmul.f32 %v815, %v716
    %v974 = vmul.f32 %v815, %v717
    %v975 = vmul.f32 %v815, %v718
    %v976 = vmul.f32 %v815, %v719
    %v977 = vmul.f32 %v815, %v720
    %v978 = vmul.f32 %v815, %v721
    %v979 = vmul.f32 %v815, %v722
    %v980 = vmul.f32 %v815, %v723
    %v981 = vmul.f32 %v815, %v724
    %v982 = vmul.f32 %v815, %v725
    %v983 = vmul.f32 %v815, %v726
    %v984 = vmul.f32 %v815, %v727
    %v985 = vmul.f32 %v815, %v728
    %v986 = vmul.f32 %v815, %v729
    %v987 = vmul.f32 %v815, %v730
    %v988 = vmul.f32 %v815, %v731
    %v989 = vmul.f32 %v815, %v732
    %v990 = vmul.f32 %v815, %v733
    %v991 = vmul.f32 %v815, %v734
    %v992 = vmul.f32 %v815, %v735
    %v993 = vmul.f32 %v815, %v736
    %v994 = vmul.f32 %v815, %v737
    %v995 = vmul.f32 %v815, %v738
    %v996 = vmul.f32 %v815, %v739
    %v997 = vmul.f32 %v815, %v740
    %v998 = vmul.f32 %v815, %v741
    %v999 = vmul.f32 %v815, %v742
    %v1000 = vmul.f32 %v815, %v743
    %v1001 = vmul.f32 %v815, %v744
    %v1002 = vmul.f32 %v815, %v745
    %v1003 = vmul.f32 %v815, %v746
    %v1004 = vmul.f32 %v815, %v747
    %v1005 = vmul.f32 %v815, %v748
    %v1006 = vmul.f32 %v815, %v749
    %v1007 = vmul.f32 %v815, %v750
    %v1008 = vmul.f32 %v815, %v751
    %v1009 = vmul.f32 %v815, %v752
    %v1010 = vmul.f32 %v815, %v753
    %v1011 = vmul.f32 %v815, %v754
    %v1012 = vmul.f32 %v815, %v755
    %v1013 = vmul.f32 %v815, %v756
    %v1014 = vmul.f32 %v815, %v757
    %v1015 = vmul.f32 %v815, %v758
    %v1016 = vmul.f32 %v815, %v759
    %v1017 = vmul.f32 %v815, %v760
    %v1018 = vmul.f32 %v815, %v761
    %v1019 = vmul.f32 %v815, %v762
    %v1020 = vmul.f32 %v815, %v763
    %v1021 = vmul.f32 %v815, %v764
    %v1022 = vmul.f32 %v815, %v765
    %v1023 = vmul.f32 %v815, %v766
    %v1024 = vmul.f32 %v815, %v767
    %v1025 = vmul.f32 %v815, %v768
    %v1026 = vmul.f32 %v815, %v769
    %v1027 = vmul.f32 %v815, %v770
    %v1028 = vmul.f32 %v815, %v771
    %v1029 = vmul.f32 %v815, %v772
    %v1030 = vmul.f32 %v815, %v773
    %v1031 = vmul.f32 %v815, %v774
    %v1032 = vmul.f32 %v815, %v775
    %v1033 = vmul.f32 %v815, %v776
    %v1034 = vmul.f32 %v815, %v777
    %v1035 = vmul.f32 %v815, %v778
    %v1036 = vmul.f32 %v815, %v779
    %v1037 = vmul.f32 %v815, %v780
    %v1038 = vmul.f32 %v815, %v781
    %v1039 = vmul.f32 %v815, %v782
    %v1040 = vmul.f32 %v815, %v783
    %v1041 = vmul.f32 %v815, %v784
    %v1042 = vmul.f32 %v815, %v785
    %v1043 = vmul.f32 %v815, %v786
    %v1044 = vmul.f32 %v815, %v787
    %v1045 = vmul.f32 %v815, %v788
    %v1046 = vmul.f32 %v815, %v789
    %v1047 = vmul.f32 %v815, %v790
    %v1048 = vmul.f32 %v815, %v791
    %v1049 = vmul.f32 %v815, %v792
    %v1050 = vmul.f32 %v815, %v793
    %v1051 = vmul.f32 %v815, %v794
    %v1052 = vmul.f32 %v815, %v795
    %v1053 = vmul.f32 %v815, %v796
    %v1054 = vmul.f32 %v815, %v797
    %v1055 = vmul.f32 %v815, %v798
    %v1056 = vmul.f32 %v815, %v799
    %v1057 = vmul.f32 %v815, %v800
    %v1058 = vmul.f32 %v815, %v801
    %v1059 = vmul.f32 %v815, %v802
    %v1060 = vmul.f32 %v815, %v803
    %v1061 = vmul.f32 %v815, %v804
    %v1062 = vmul.f32 %v815, %v805
    %v1063 = vmul.f32 %v815, %v806
    %v1064 = vmul.f32 %v815, %v807
    %v1065 = vmul.f32 %v815, %v808
    %v1066 = vmul.f32 %v815, %v809
    %v1067 = vmul.f32 %v815, %v810
    %v1068 = vmul.f32 %v815, %v811
    %v1069 = vmul.f32 %v815, %v812
    %v1070 = vmul.f32 %v815, %v813
    %v1071 = vmul.f32 %v815, %v814
    %v1072 = vadd.f32 %v302, %v816
    %v1073 = vadd.f32 %v303, %v817
    %v1074 = vadd.f32 %v304, %v818
    %v1075 = vadd.f32 %v305, %v819
    %v1076 = vadd.f32 %v306, %v820
    %v1077 = vadd.f32 %v307, %v821
    %v1078 = vadd.f32 %v308, %v822
    %v1079 = vadd.f32 %v309, %v823
    %v1080 = vadd.f32 %v310, %v824
    %v1081 = vadd.f32 %v311, %v825
    %v1082 = vadd.f32 %v312, %v826
    %v1083 = vadd.f32 %v313, %v827
    %v1084 = vadd.f32 %v314, %v828
    %v1085 = vadd.f32 %v315, %v829
    %v1086 = vadd.f32 %v316, %v830
    %v1087 = vadd.f32 %v317, %v831
    %v1088 = vadd.f32 %v318, %v832
    %v1089 = vadd.f32 %v319, %v833
    %v1090 = vadd.f32 %v320, %v834
    %v1091 = vadd.f32 %v321, %v835
    %v1092 = vadd.f32 %v322, %v836
    %v1093 = vadd.f32 %v323, %v837
    %v1094 = vadd.f32 %v324, %v838
    %v1095 = vadd.f32 %v325, %v839
    %v1096 = vadd.f32 %v326, %v840
    %v1097 = vadd.f32 %v327, %v841
    %v1098 = vadd.f32 %v328, %v842
    %v1099 = vadd.f32 %v329, %v843
    %v1100 = vadd.f32 %v330, %v844
    %v1101 = vadd.f32 %v331, %v845
    %v1102 = vadd.f32 %v332, %v846
    %v1103 = vadd.f32 %v333, %v847
    %v1104 = vadd.f32 %v334, %v848
    %v1105 = vadd.f32 %v335, %v849
    %v1106 = vadd.f32 %v336, %v850
    %v1107 = vadd.f32 %v337, %v851
    %v1108 = vadd.f32 %v338, %v852
    %v1109 = vadd.f32 %v339, %v853
    %v1110 = vadd.f32 %v340, %v854
    %v1111 = vadd.f32 %v341, %v855
    %v1112 = vadd.f32 %v342, %v856
    %v1113 = vadd.f32 %v343, %v857
    %v1114 = vadd.f32 %v344, %v858
    %v1115 = vadd.f32 %v345, %v859
    %v1116 = vadd.f32 %v346, %v860
    %v1117 = vadd.f32 %v347, %v861
    %v1118 = vadd.f32 %v348, %v862
    %v1119 = vadd.f32 %v349, %v863
    %v1120 = vadd.f32 %v350, %v864
    %v1121 = vadd.f32 %v351, %v865
    %v1122 = vadd.f32 %v352, %v866
    %v1123 = vadd.f32 %v353, %v867
    %v1124 = vadd.f32 %v354, %v868
    %v1125 = vadd.f32 %v355, %v869
    %v1126 = vadd.f32 %v356, %v870
    %v1127 = vadd.f32 %v357, %v871
    %v1128 = vadd.f32 %v358, %v872
    %v1129 = vadd.f32 %v359, %v873
    %v1130 = vadd.f32 %v360, %v874
    %v1131 = vadd.f32 %v361, %v875
    %v1132 = vadd.f32 %v362, %v876
    %v1133 = vadd.f32 %v363, %v877
    %v1134 = vadd.f32 %v364, %v878
    %v1135 = vadd.f32 %v365, %v879
    %v1136 = vadd.f32 %v366, %v880
    %v1137 = vadd.f32 %v367, %v881
    %v1138 = vadd.f32 %v368, %v882
    %v1139 = vadd.f32 %v369, %v883
    %v1140 = vadd.f32 %v370, %v884
    %v1141 = vadd.f32 %v371, %v885
    %v1142 = vadd.f32 %v372, %v886
    %v1143 = vadd.f32 %v373, %v887
    %v1144 = vadd.f32 %v374, %v888
    %v1145 = vadd.f32 %v375, %v889
    %v1146 = vadd.f32 %v376, %v890
    %v1147 = vadd.f32 %v377, %v891
    %v1148 = vadd.f32 %v378, %v892
    %v1149 = vadd.f32 %v379, %v893
    %v1150 = vadd.f32 %v380, %v894
    %v1151 = vadd.f32 %v381, %v895
    %v1152 = vadd.f32 %v382, %v896
    %v1153 = vadd.f32 %v383, %v897
    %v1154 = vadd.f32 %v384, %v898
    %v1155 = vadd.f32 %v385, %v899
    %v1156 = vadd.f32 %v386, %v900
    %v1157 = vadd.f32 %v387, %v901
    %v1158 = vadd.f32 %v388, %v902
    %v1159 = vadd.f32 %v389, %v903
    %v1160 = vadd.f32 %v390, %v904
    %v1161 = vadd.f32 %v391, %v905
    %v1162 = vadd.f32 %v392, %v906
    %v1163 = vadd.f32 %v393, %v907
    %v1164 = vadd.f32 %v394, %v908
    %v1165 = vadd.f32 %v395, %v909
    %v1166 = vadd.f32 %v396, %v910
    %v1167 = vadd.f32 %v397, %v911
    %v1168 = vadd.f32 %v398, %v912
    %v1169 = vadd.f32 %v399, %v913
    %v1170 = vadd.f32 %v400, %v914
    %v1171 = vadd.f32 %v401, %v915
    %v1172 = vadd.f32 %v402, %v916
    %v1173 = vadd.f32 %v403, %v917
    %v1174 = vadd.f32 %v404, %v918
    %v1175 = vadd.f32 %v405, %v919
    %v1176 = vadd.f32 %v406, %v920
    %v1177 = vadd.f32 %v407, %v921
    %v1178 = vadd.f32 %v408, %v922
    %v1179 = vadd.f32 %v409, %v923
    %v1180 = vadd.f32 %v410, %v924
    %v1181 = vadd.f32 %v411, %v925
    %v1182 = vadd.f32 %v412, %v926
    %v1183 = vadd.f32 %v413, %v927
    %v1184 = vadd.f32 %v414, %v928
    %v1185 = vadd.f32 %v415, %v929
    %v1186 = vadd.f32 %v416, %v930
    %v1187 = vadd.f32 %v417, %v931
    %v1188 = vadd.f32 %v418, %v932
    %v1189 = vadd.f32 %v419, %v933
    %v1190 = vadd.f32 %v420, %v934
    %v1191 = vadd.f32 %v421, %v935
    %v1192 = vadd.f32 %v422, %v936
    %v1193 = vadd.f32 %v423, %v937
    %v1194 = vadd.f32 %v424, %v938
    %v1195 = vadd.f32 %v425, %v939
    %v1196 = vadd.f32 %v426, %v940
    %v1197 = vadd.f32 %v427, %v941
    %v1198 = vadd.f32 %v428, %v942
    %v1199 = vadd.f32 %v429, %v943
    %v1200 = vadd.f32 %v430, %v944
    %v1201 = vadd.f32 %v431, %v945
    %v1202 = vadd.f32 %v432, %v946
    %v1203 = vadd.f32 %v433, %v947
    %v1204 = vadd.f32 %v434, %v948
    %v1205 = vadd.f32 %v435, %v949
    %v1206 = vadd.f32 %v436, %v950
    %v1207 = vadd.f32 %v437, %v951
    %v1208 = vadd.f32 %v438, %v952
    %v1209 = vadd.f32 %v439, %v953
    %v1210 = vadd.f32 %v440, %v954
    %v1211 = vadd.f32 %v441, %v955
    %v1212 = vadd.f32 %v442, %v956
    %v1213 = vadd.f32 %v443, %v957
    %v1214 = vadd.f32 %v444, %v958
    %v1215 = vadd.f32 %v445, %v959
    %v1216 = vadd.f32 %v446, %v960
    %v1217 = vadd.f32 %v447, %v961
    %v1218 = vadd.f32 %v448, %v962
    %v1219 = vadd.f32 %v449, %v963
    %v1220 = vadd.f32 %v450, %v964
    %v1221 = vadd.f32 %v451, %v965
    %v1222 = vadd.f32 %v452, %v966
    %v1223 = vadd.f32 %v453, %v967
    %v1224 = vadd.f32 %v454, %v968
    %v1225 = vadd.f32 %v455, %v969
    %v1226 = vadd.f32 %v456, %v970
    %v1227 = vadd.f32 %v457, %v971
    %v1228 = vadd.f32 %v458, %v972
    %v1229 = vadd.f32 %v459, %v973
    %v1230 = vadd.f32 %v460, %v974
    %v1231 = vadd.f32 %v461, %v975
    %v1232 = vadd.f32 %v462, %v976
    %v1233 = vadd.f32 %v463, %v977
    %v1234 = vadd.f32 %v464, %v978
    %v1235 = vadd.f32 %v465, %v979
    %v1236 = vadd.f32 %v466, %v980
    %v1237 = vadd.f32 %v467, %v981
    %v1238 = vadd.f32 %v468, %v982
    %v1239 = vadd.f32 %v469, %v983
    %v1240 = vadd.f32 %v470, %v984
    %v1241 = vadd.f32 %v471, %v985
    %v1242 = vadd.f32 %v472, %v986
    %v1243 = vadd.f32 %v473, %v987
    %v1244 = vadd.f32 %v474, %v988
    %v1245 = vadd.f32 %v475, %v989
    %v1246 = vadd.f32 %v476, %v990
    %v1247 = vadd.f32 %v477, %v991
    %v1248 = vadd.f32 %v478, %v992
    %v1249 = vadd.f32 %v479, %v993
    %v1250 = vadd.f32 %v480, %v994
    %v1251 = vadd.f32 %v481, %v995
    %v1252 = vadd.f32 %v482, %v996
    %v1253 = vadd.f32 %v483, %v997
    %v1254 = vadd.f32 %v484, %v998
    %v1255 = vadd.f32 %v485, %v999
    %v1256 = vadd.f32 %v486, %v1000
    %v1257 = vadd.f32 %v487, %v1001
    %v1258 = vadd.f32 %v488, %v1002
    %v1259 = vadd.f32 %v489, %v1003
    %v1260 = vadd.f32 %v490, %v1004
    %v1261 = vadd.f32 %v491, %v1005
    %v1262 = vadd.f32 %v492, %v1006
    %v1263 = vadd.f32 %v493, %v1007
    %v1264 = vadd.f32 %v494, %v1008
    %v1265 = vadd.f32 %v495, %v1009
    %v1266 = vadd.f32 %v496, %v1010
    %v1267 = vadd.f32 %v497, %v1011
    %v1268 = vadd.f32 %v498, %v1012
    %v1269 = vadd.f32 %v499, %v1013
    %v1270 = vadd.f32 %v500, %v1014
    %v1271 = vadd.f32 %v501, %v1015
    %v1272 = vadd.f32 %v502, %v1016
    %v1273 = vadd.f32 %v503, %v1017
    %v1274 = vadd.f32 %v504, %v1018
    %v1275 = vadd.f32 %v505, %v1019
    %v1276 = vadd.f32 %v506, %v1020
    %v1277 = vadd.f32 %v507, %v1021
    %v1278 = vadd.f32 %v508, %v1022
    %v1279 = vadd.f32 %v509, %v1023
    %v1280 = vadd.f32 %v510, %v1024
    %v1281 = vadd.f32 %v511, %v1025
    %v1282 = vadd.f32 %v512, %v1026
    %v1283 = vadd.f32 %v513, %v1027
    %v1284 = vadd.f32 %v514, %v1028
    %v1285 = vadd.f32 %v515, %v1029
    %v1286 = vadd.f32 %v516, %v1030
    %v1287 = vadd.f32 %v517, %v1031
    %v1288 = vadd.f32 %v518, %v1032
    %v1289 = vadd.f32 %v519, %v1033
    %v1290 = vadd.f32 %v520, %v1034
    %v1291 = vadd.f32 %v521, %v1035
    %v1292 = vadd.f32 %v522, %v1036
    %v1293 = vadd.f32 %v523, %v1037
    %v1294 = vadd.f32 %v524, %v1038
    %v1295 = vadd.f32 %v525, %v1039
    %v1296 = vadd.f32 %v526, %v1040
    %v1297 = vadd.f32 %v527, %v1041
    %v1298 = vadd.f32 %v528, %v1042
    %v1299 = vadd.f32 %v529, %v1043
    %v1300 = vadd.f32 %v530, %v1044
    %v1301 = vadd.f32 %v531, %v1045
    %v1302 = vadd.f32 %v532, %v1046
    %v1303 = vadd.f32 %v533, %v1047
    %v1304 = vadd.f32 %v534, %v1048
    %v1305 = vadd.f32 %v535, %v1049
    %v1306 = vadd.f32 %v536, %v1050
    %v1307 = vadd.f32 %v537, %v1051
    %v1308 = vadd.f32 %v538, %v1052
    %v1309 = vadd.f32 %v539, %v1053
    %v1310 = vadd.f32 %v540, %v1054
    %v1311 = vadd.f32 %v541, %v1055
    %v1312 = vadd.f32 %v542, %v1056
    %v1313 = vadd.f32 %v543, %v1057
    %v1314 = vadd.f32 %v544, %v1058
    %v1315 = vadd.f32 %v545, %v1059
    %v1316 = vadd.f32 %v546, %v1060
    %v1317 = vadd.f32 %v547, %v1061
    %v1318 = vadd.f32 %v548, %v1062
    %v1319 = vadd.f32 %v549, %v1063
    %v1320 = vadd.f32 %v550, %v1064
    %v1321 = vadd.f32 %v551, %v1065
    %v1322 = vadd.f32 %v552, %v1066
    %v1323 = vadd.f32 %v553, %v1067
    %v1324 = vadd.f32 %v554, %v1068
    %v1325 = vadd.f32 %v555, %v1069
    %v1326 = vadd.f32 %v556, %v1070
    %v1327 = vadd.f32 %v557, %v1071
    %1328 = vst [vmem:[#allocation8] sm:$0xff] %v1072
    %1329 = vst [vmem:[#allocation8 + $0x8] sm:$0xff] %v1073
    %1330 = vst [vmem:[#allocation8 + $0x10] sm:$0xff] %v1074
    %1331 = vst [vmem:[#allocation8 + $0x18] sm:$0xff] %v1075
    %1332 = vst [vmem:[#allocation8 + $0x20] sm:$0xff] %v1076
    %1333 = vst [vmem:[#allocation8 + $0x28] sm:$0xff] %v1077
    %1334 = vst [vmem:[#allocation8 + $0x30] sm:$0xff] %v1078
    %1335 = vst [vmem:[#allocation8 + $0x38] sm:$0xff] %v1079
    %1336 = vst [vmem:[#allocation8 + $0x40] sm:$0xff] %v1080
    %1337 = vst [vmem:[#allocation8 + $0x48] sm:$0xff] %v1081
    %1338 = vst [vmem:[#allocation8 + $0x50] sm:$0xff] %v1082
    %1339 = vst [vmem:[#allocation8 + $0x58] sm:$0xff] %v1083
    %1340 = vst [vmem:[#allocation8 + $0x60] sm:$0xff] %v1084
    %1341 = vst [vmem:[#allocation8 + $0x68] sm:$0xff] %v1085
    %1342 = vst [vmem:[#allocation8 + $0x70] sm:$0xff] %v1086
    %1343 = vst [vmem:[#allocation8 + $0x78] sm:$0xff] %v1087
    %1344 = vst [vmem:[#allocation8 + $0x80] sm:$0xff] %v1088
    %1345 = vst [vmem:[#allocation8 + $0x88] sm:$0xff] %v1089
    %1346 = vst [vmem:[#allocation8 + $0x90] sm:$0xff] %v1090
    %1347 = vst [vmem:[#allocation8 + $0x98] sm:$0xff] %v1091
    %1348 = vst [vmem:[#allocation8 + $0xa0] sm:$0xff] %v1092
    %1349 = vst [vmem:[#allocation8 + $0xa8] sm:$0xff] %v1093
    %1350 = vst [vmem:[#allocation8 + $0xb0] sm:$0xff] %v1094
    %1351 = vst [vmem:[#allocation8 + $0xb8] sm:$0xff] %v1095
    %1352 = vst [vmem:[#allocation8 + $0xc0] sm:$0xff] %v1096
    %1353 = vst [vmem:[#allocation8 + $0xc8] sm:$0xff] %v1097
    %1354 = vst [vmem:[#allocation8 + $0xd0] sm:$0xff] %v1098
    %1355 = vst [vmem:[#allocation8 + $0xd8] sm:$0xff] %v1099
    %1356 = vst [vmem:[#allocation8 + $0xe0] sm:$0xff] %v1100
    %1357 = vst [vmem:[#allocation8 + $0xe8] sm:$0xff] %v1101
    %1358 = vst [vmem:[#allocation8 + $0xf0] sm:$0xff] %v1102
    %1359 = vst [vmem:[#allocation8 + $0xf8] sm:$0xff] %v1103
    %1360 = vst [vmem:[#allocation8 + $0x100] sm:$0xff] %v1104
    %1361 = vst [vmem:[#allocation8 + $0x108] sm:$0xff] %v1105
    %1362 = vst [vmem:[#allocation8 + $0x110] sm:$0xff] %v1106
    %1363 = vst [vmem:[#allocation8 + $0x118] sm:$0xff] %v1107
    %1364 = vst [vmem:[#allocation8 + $0x120] sm:$0xff] %v1108
    %1365 = vst [vmem:[#allocation8 + $0x128] sm:$0xff] %v1109
    %1366 = vst [vmem:[#allocation8 + $0x130] sm:$0xff] %v1110
    %1367 = vst [vmem:[#allocation8 + $0x138] sm:$0xff] %v1111
    %1368 = vst [vmem:[#allocation8 + $0x140] sm:$0xff] %v1112
    %1369 = vst [vmem:[#allocation8 + $0x148] sm:$0xff] %v1113
    %1370 = vst [vmem:[#allocation8 + $0x150] sm:$0xff] %v1114
    %1371 = vst [vmem:[#allocation8 + $0x158] sm:$0xff] %v1115
    %1372 = vst [vmem:[#allocation8 + $0x160] sm:$0xff] %v1116
    %1373 = vst [vmem:[#allocation8 + $0x168] sm:$0xff] %v1117
    %1374 = vst [vmem:[#allocation8 + $0x170] sm:$0xff] %v1118
    %1375 = vst [vmem:[#allocation8 + $0x178] sm:$0xff] %v1119
    %1376 = vst [vmem:[#allocation8 + $0x180] sm:$0xff] %v1120
    %1377 = vst [vmem:[#allocation8 + $0x188] sm:$0xff] %v1121
    %1378 = vst [vmem:[#allocation8 + $0x190] sm:$0xff] %v1122
    %1379 = vst [vmem:[#allocation8 + $0x198] sm:$0xff] %v1123
    %1380 = vst [vmem:[#allocation8 + $0x1a0] sm:$0xff] %v1124
    %1381 = vst [vmem:[#allocation8 + $0x1a8] sm:$0xff] %v1125
    %1382 = vst [vmem:[#allocation8 + $0x1b0] sm:$0xff] %v1126
    %1383 = vst [vmem:[#allocation8 + $0x1b8] sm:$0xff] %v1127
    %1384 = vst [vmem:[#allocation8 + $0x1c0] sm:$0xff] %v1128
    %1385 = vst [vmem:[#allocation8 + $0x1c8] sm:$0xff] %v1129
    %1386 = vst [vmem:[#allocation8 + $0x1d0] sm:$0xff] %v1130
    %1387 = vst [vmem:[#allocation8 + $0x1d8] sm:$0xff] %v1131
    %1388 = vst [vmem:[#allocation8 + $0x1e0] sm:$0xff] %v1132
    %1389 = vst [vmem:[#allocation8 + $0x1e8] sm:$0xff] %v1133
    %1390 = vst [vmem:[#allocation8 + $0x1f0] sm:$0xff] %v1134
    %1391 = vst [vmem:[#allocation8 + $0x1f8] sm:$0xff] %v1135
    %1392 = vst [vmem:[#allocation8 + $0x200] sm:$0xff] %v1136
    %1393 = vst [vmem:[#allocation8 + $0x208] sm:$0xff] %v1137
    %1394 = vst [vmem:[#allocation8 + $0x210] sm:$0xff] %v1138
    %1395 = vst [vmem:[#allocation8 + $0x218] sm:$0xff] %v1139
    %1396 = vst [vmem:[#allocation8 + $0x220] sm:$0xff] %v1140
    %1397 = vst [vmem:[#allocation8 + $0x228] sm:$0xff] %v1141
    %1398 = vst [vmem:[#allocation8 + $0x230] sm:$0xff] %v1142
    %1399 = vst [vmem:[#allocation8 + $0x238] sm:$0xff] %v1143
    %1400 = vst [vmem:[#allocation8 + $0x240] sm:$0xff] %v1144
    %1401 = vst [vmem:[#allocation8 + $0x248] sm:$0xff] %v1145
    %1402 = vst [vmem:[#allocation8 + $0x250] sm:$0xff] %v1146
    %1403 = vst [vmem:[#allocation8 + $0x258] sm:$0xff] %v1147
    %1404 = vst [vmem:[#allocation8 + $0x260] sm:$0xff] %v1148
    %1405 = vst [vmem:[#allocation8 + $0x268] sm:$0xff] %v1149
    %1406 = vst [vmem:[#allocation8 + $0x270] sm:$0xff] %v1150
    %1407 = vst [vmem:[#allocation8 + $0x278] sm:$0xff] %v1151
    %1408 = vst [vmem:[#allocation8 + $0x280] sm:$0xff] %v1152
    %1409 = vst [vmem:[#allocation8 + $0x288] sm:$0xff] %v1153
    %1410 = vst [vmem:[#allocation8 + $0x290] sm:$0xff] %v1154
    %1411 = vst [vmem:[#allocation8 + $0x298] sm:$0xff] %v1155
    %1412 = vst [vmem:[#allocation8 + $0x2a0] sm:$0xff] %v1156
    %1413 = vst [vmem:[#allocation8 + $0x2a8] sm:$0xff] %v1157
    %1414 = vst [vmem:[#allocation8 + $0x2b0] sm:$0xff] %v1158
    %1415 = vst [vmem:[#allocation8 + $0x2b8] sm:$0xff] %v1159
    %1416 = vst [vmem:[#allocation8 + $0x2c0] sm:$0xff] %v1160
    %1417 = vst [vmem:[#allocation8 + $0x2c8] sm:$0xff] %v1161
    %1418 = vst [vmem:[#allocation8 + $0x2d0] sm:$0xff] %v1162
    %1419 = vst [vmem:[#allocation8 + $0x2d8] sm:$0xff] %v1163
    %1420 = vst [vmem:[#allocation8 + $0x2e0] sm:$0xff] %v1164
    %1421 = vst [vmem:[#allocation8 + $0x2e8] sm:$0xff] %v1165
    %1422 = vst [vmem:[#allocation8 + $0x2f0] sm:$0xff] %v1166
    %1423 = vst [vmem:[#allocation8 + $0x2f8] sm:$0xff] %v1167
    %1424 = vst [vmem:[#allocation8 + $0x300] sm:$0xff] %v1168
    %1425 = vst [vmem:[#allocation8 + $0x308] sm:$0xff] %v1169
    %1426 = vst [vmem:[#allocation8 + $0x310] sm:$0xff] %v1170
    %1427 = vst [vmem:[#allocation8 + $0x318] sm:$0xff] %v1171
    %1428 = vst [vmem:[#allocation8 + $0x320] sm:$0xff] %v1172
    %1429 = vst [vmem:[#allocation8 + $0x328] sm:$0xff] %v1173
    %1430 = vst [vmem:[#allocation8 + $0x330] sm:$0xff] %v1174
    %1431 = vst [vmem:[#allocation8 + $0x338] sm:$0xff] %v1175
    %1432 = vst [vmem:[#allocation8 + $0x340] sm:$0xff] %v1176
    %1433 = vst [vmem:[#allocation8 + $0x348] sm:$0xff] %v1177
    %1434 = vst [vmem:[#allocation8 + $0x350] sm:$0xff] %v1178
    %1435 = vst [vmem:[#allocation8 + $0x358] sm:$0xff] %v1179
    %1436 = vst [vmem:[#allocation8 + $0x360] sm:$0xff] %v1180
    %1437 = vst [vmem:[#allocation8 + $0x368] sm:$0xff] %v1181
    %1438 = vst [vmem:[#allocation8 + $0x370] sm:$0xff] %v1182
    %1439 = vst [vmem:[#allocation8 + $0x378] sm:$0xff] %v1183
    %1440 = vst [vmem:[#allocation8 + $0x380] sm:$0xff] %v1184
    %1441 = vst [vmem:[#allocation8 + $0x388] sm:$0xff] %v1185
    %1442 = vst [vmem:[#allocation8 + $0x390] sm:$0xff] %v1186
    %1443 = vst [vmem:[#allocation8 + $0x398] sm:$0xff] %v1187
    %1444 = vst [vmem:[#allocation8 + $0x3a0] sm:$0xff] %v1188
    %1445 = vst [vmem:[#allocation8 + $0x3a8] sm:$0xff] %v1189
    %1446 = vst [vmem:[#allocation8 + $0x3b0] sm:$0xff] %v1190
    %1447 = vst [vmem:[#allocation8 + $0x3b8] sm:$0xff] %v1191
    %1448 = vst [vmem:[#allocation8 + $0x3c0] sm:$0xff] %v1192
    %1449 = vst [vmem:[#allocation8 + $0x3c8] sm:$0xff] %v1193
    %1450 = vst [vmem:[#allocation8 + $0x3d0] sm:$0xff] %v1194
    %1451 = vst [vmem:[#allocation8 + $0x3d8] sm:$0xff] %v1195
    %1452 = vst [vmem:[#allocation8 + $0x3e0] sm:$0xff] %v1196
    %1453 = vst [vmem:[#allocation8 + $0x3e8] sm:$0xff] %v1197
    %1454 = vst [vmem:[#allocation8 + $0x3f0] sm:$0xff] %v1198
    %1455 = vst [vmem:[#allocation8 + $0x3f8] sm:$0xff] %v1199
    %1456 = vst [vmem:[#allocation8 + $0x400] sm:$0xff] %v1200
    %1457 = vst [vmem:[#allocation8 + $0x408] sm:$0xff] %v1201
    %1458 = vst [vmem:[#allocation8 + $0x410] sm:$0xff] %v1202
    %1459 = vst [vmem:[#allocation8 + $0x418] sm:$0xff] %v1203
    %1460 = vst [vmem:[#allocation8 + $0x420] sm:$0xff] %v1204
    %1461 = vst [vmem:[#allocation8 + $0x428] sm:$0xff] %v1205
    %1462 = vst [vmem:[#allocation8 + $0x430] sm:$0xff] %v1206
    %1463 = vst [vmem:[#allocation8 + $0x438] sm:$0xff] %v1207
    %1464 = vst [vmem:[#allocation8 + $0x440] sm:$0xff] %v1208
    %1465 = vst [vmem:[#allocation8 + $0x448] sm:$0xff] %v1209
    %1466 = vst [vmem:[#allocation8 + $0x450] sm:$0xff] %v1210
    %1467 = vst [vmem:[#allocation8 + $0x458] sm:$0xff] %v1211
    %1468 = vst [vmem:[#allocation8 + $0x460] sm:$0xff] %v1212
    %1469 = vst [vmem:[#allocation8 + $0x468] sm:$0xff] %v1213
    %1470 = vst [vmem:[#allocation8 + $0x470] sm:$0xff] %v1214
    %1471 = vst [vmem:[#allocation8 + $0x478] sm:$0xff] %v1215
    %1472 = vst [vmem:[#allocation8 + $0x480] sm:$0xff] %v1216
    %1473 = vst [vmem:[#allocation8 + $0x488] sm:$0xff] %v1217
    %1474 = vst [vmem:[#allocation8 + $0x490] sm:$0xff] %v1218
    %1475 = vst [vmem:[#allocation8 + $0x498] sm:$0xff] %v1219
    %1476 = vst [vmem:[#allocation8 + $0x4a0] sm:$0xff] %v1220
    %1477 = vst [vmem:[#allocation8 + $0x4a8] sm:$0xff] %v1221
    %1478 = vst [vmem:[#allocation8 + $0x4b0] sm:$0xff] %v1222
    %1479 = vst [vmem:[#allocation8 + $0x4b8] sm:$0xff] %v1223
    %1480 = vst [vmem:[#allocation8 + $0x4c0] sm:$0xff] %v1224
    %1481 = vst [vmem:[#allocation8 + $0x4c8] sm:$0xff] %v1225
    %1482 = vst [vmem:[#allocation8 + $0x4d0] sm:$0xff] %v1226
    %1483 = vst [vmem:[#allocation8 + $0x4d8] sm:$0xff] %v1227
    %1484 = vst [vmem:[#allocation8 + $0x4e0] sm:$0xff] %v1228
    %1485 = vst [vmem:[#allocation8 + $0x4e8] sm:$0xff] %v1229
    %1486 = vst [vmem:[#allocation8 + $0x4f0] sm:$0xff] %v1230
    %1487 = vst [vmem:[#allocation8 + $0x4f8] sm:$0xff] %v1231
    %1488 = vst [vmem:[#allocation8 + $0x500] sm:$0xff] %v1232
    %1489 = vst [vmem:[#allocation8 + $0x508] sm:$0xff] %v1233
    %1490 = vst [vmem:[#allocation8 + $0x510] sm:$0xff] %v1234
    %1491 = vst [vmem:[#allocation8 + $0x518] sm:$0xff] %v1235
    %1492 = vst [vmem:[#allocation8 + $0x520] sm:$0xff] %v1236
    %1493 = vst [vmem:[#allocation8 + $0x528] sm:$0xff] %v1237
    %1494 = vst [vmem:[#allocation8 + $0x530] sm:$0xff] %v1238
    %1495 = vst [vmem:[#allocation8 + $0x538] sm:$0xff] %v1239
    %1496 = vst [vmem:[#allocation8 + $0x540] sm:$0xff] %v1240
    %1497 = vst [vmem:[#allocation8 + $0x548] sm:$0xff] %v1241
    %1498 = vst [vmem:[#allocation8 + $0x550] sm:$0xff] %v1242
    %1499 = vst [vmem:[#allocation8 + $0x558] sm:$0xff] %v1243
    %1500 = vst [vmem:[#allocation8 + $0x560] sm:$0xff] %v1244
    %1501 = vst [vmem:[#allocation8 + $0x568] sm:$0xff] %v1245
    %1502 = vst [vmem:[#allocation8 + $0x570] sm:$0xff] %v1246
    %1503 = vst [vmem:[#allocation8 + $0x578] sm:$0xff] %v1247
    %1504 = vst [vmem:[#allocation8 + $0x580] sm:$0xff] %v1248
    %1505 = vst [vmem:[#allocation8 + $0x588] sm:$0xff] %v1249
    %1506 = vst [vmem:[#allocation8 + $0x590] sm:$0xff] %v1250
    %1507 = vst [vmem:[#allocation8 + $0x598] sm:$0xff] %v1251
    %1508 = vst [vmem:[#allocation8 + $0x5a0] sm:$0xff] %v1252
    %1509 = vst [vmem:[#allocation8 + $0x5a8] sm:$0xff] %v1253
    %1510 = vst [vmem:[#allocation8 + $0x5b0] sm:$0xff] %v1254
    %1511 = vst [vmem:[#allocation8 + $0x5b8] sm:$0xff] %v1255
    %1512 = vst [vmem:[#allocation8 + $0x5c0] sm:$0xff] %v1256
    %1513 = vst [vmem:[#allocation8 + $0x5c8] sm:$0xff] %v1257
    %1514 = vst [vmem:[#allocation8 + $0x5d0] sm:$0xff] %v1258
    %1515 = vst [vmem:[#allocation8 + $0x5d8] sm:$0xff] %v1259
    %1516 = vst [vmem:[#allocation8 + $0x5e0] sm:$0xff] %v1260
    %1517 = vst [vmem:[#allocation8 + $0x5e8] sm:$0xff] %v1261
    %1518 = vst [vmem:[#allocation8 + $0x5f0] sm:$0xff] %v1262
    %1519 = vst [vmem:[#allocation8 + $0x5f8] sm:$0xff] %v1263
    %1520 = vst [vmem:[#allocation8 + $0x600] sm:$0xff] %v1264
    %1521 = vst [vmem:[#allocation8 + $0x608] sm:$0xff] %v1265
    %1522 = vst [vmem:[#allocation8 + $0x610] sm:$0xff] %v1266
    %1523 = vst [vmem:[#allocation8 + $0x618] sm:$0xff] %v1267
    %1524 = vst [vmem:[#allocation8 + $0x620] sm:$0xff] %v1268
    %1525 = vst [vmem:[#allocation8 + $0x628] sm:$0xff] %v1269
    %1526 = vst [vmem:[#allocation8 + $0x630] sm:$0xff] %v1270
    %1527 = vst [vmem:[#allocation8 + $0x638] sm:$0xff] %v1271
    %1528 = vst [vmem:[#allocation8 + $0x640] sm:$0xff] %v1272
    %1529 = vst [vmem:[#allocation8 + $0x648] sm:$0xff] %v1273
    %1530 = vst [vmem:[#allocation8 + $0x650] sm:$0xff] %v1274
    %1531 = vst [vmem:[#allocation8 + $0x658] sm:$0xff] %v1275
    %1532 = vst [vmem:[#allocation8 + $0x660] sm:$0xff] %v1276
    %1533 = vst [vmem:[#allocation8 + $0x668] sm:$0xff] %v1277
    %1534 = vst [vmem:[#allocation8 + $0x670] sm:$0xff] %v1278
    %1535 = vst [vmem:[#allocation8 + $0x678] sm:$0xff] %v1279
    %1536 = vst [vmem:[#allocation8 + $0x680] sm:$0xff] %v1280
    %1537 = vst [vmem:[#allocation8 + $0x688] sm:$0xff] %v1281
    %1538 = vst [vmem:[#allocation8 + $0x690] sm:$0xff] %v1282
    %1539 = vst [vmem:[#allocation8 + $0x698] sm:$0xff] %v1283
    %1540 = vst [vmem:[#allocation8 + $0x6a0] sm:$0xff] %v1284
    %1541 = vst [vmem:[#allocation8 + $0x6a8] sm:$0xff] %v1285
    %1542 = vst [vmem:[#allocation8 + $0x6b0] sm:$0xff] %v1286
    %1543 = vst [vmem:[#allocation8 + $0x6b8] sm:$0xff] %v1287
    %1544 = vst [vmem:[#allocation8 + $0x6c0] sm:$0xff] %v1288
    %1545 = vst [vmem:[#allocation8 + $0x6c8] sm:$0xff] %v1289
    %1546 = vst [vmem:[#allocation8 + $0x6d0] sm:$0xff] %v1290
    %1547 = vst [vmem:[#allocation8 + $0x6d8] sm:$0xff] %v1291
    %1548 = vst [vmem:[#allocation8 + $0x6e0] sm:$0xff] %v1292
    %1549 = vst [vmem:[#allocation8 + $0x6e8] sm:$0xff] %v1293
    %1550 = vst [vmem:[#allocation8 + $0x6f0] sm:$0xff] %v1294
    %1551 = vst [vmem:[#allocation8 + $0x6f8] sm:$0xff] %v1295
    %1552 = vst [vmem:[#allocation8 + $0x700] sm:$0xff] %v1296
    %1553 = vst [vmem:[#allocation8 + $0x708] sm:$0xff] %v1297
    %1554 = vst [vmem:[#allocation8 + $0x710] sm:$0xff] %v1298
    %1555 = vst [vmem:[#allocation8 + $0x718] sm:$0xff] %v1299
    %1556 = vst [vmem:[#allocation8 + $0x720] sm:$0xff] %v1300
    %1557 = vst [vmem:[#allocation8 + $0x728] sm:$0xff] %v1301
    %1558 = vst [vmem:[#allocation8 + $0x730] sm:$0xff] %v1302
    %1559 = vst [vmem:[#allocation8 + $0x738] sm:$0xff] %v1303
    %1560 = vst [vmem:[#allocation8 + $0x740] sm:$0xff] %v1304
    %1561 = vst [vmem:[#allocation8 + $0x748] sm:$0xff] %v1305
    %1562 = vst [vmem:[#allocation8 + $0x750] sm:$0xff] %v1306
    %1563 = vst [vmem:[#allocation8 + $0x758] sm:$0xff] %v1307
    %1564 = vst [vmem:[#allocation8 + $0x760] sm:$0xff] %v1308
    %1565 = vst [vmem:[#allocation8 + $0x768] sm:$0xff] %v1309
    %1566 = vst [vmem:[#allocation8 + $0x770] sm:$0xff] %v1310
    %1567 = vst [vmem:[#allocation8 + $0x778] sm:$0xff] %v1311
    %1568 = vst [vmem:[#allocation8 + $0x780] sm:$0xff] %v1312
    %1569 = vst [vmem:[#allocation8 + $0x788] sm:$0xff] %v1313
    %1570 = vst [vmem:[#allocation8 + $0x790] sm:$0xff] %v1314
    %1571 = vst [vmem:[#allocation8 + $0x798] sm:$0xff] %v1315
    %1572 = vst [vmem:[#allocation8 + $0x7a0] sm:$0xff] %v1316
    %1573 = vst [vmem:[#allocation8 + $0x7a8] sm:$0xff] %v1317
    %1574 = vst [vmem:[#allocation8 + $0x7b0] sm:$0xff] %v1318
    %1575 = vst [vmem:[#allocation8 + $0x7b8] sm:$0xff] %v1319
    %1576 = vst [vmem:[#allocation8 + $0x7c0] sm:$0xff] %v1320
    %1577 = vst [vmem:[#allocation8 + $0x7c8] sm:$0xff] %v1321
    %1578 = vst [vmem:[#allocation8 + $0x7d0] sm:$0xff] %v1322
    %1579 = vst [vmem:[#allocation8 + $0x7d8] sm:$0xff] %v1323
    %1580 = vst [vmem:[#allocation8 + $0x7e0] sm:$0xff] %v1324
    %1581 = vst [vmem:[#allocation8 + $0x7e8] sm:$0xff] %v1325
    %1582 = vst [vmem:[#allocation8 + $0x7f0] sm:$0xff] %v1326
    %1583 = vst [vmem:[#allocation8 + $0x7f8] sm:$0xff] %v1327
    // Predicated region
    $region22: #{tpu_custom_call.1} parent=1 // pred_check
      _
    $region23: #{tpu_custom_call.1} parent=1 // pred_check_branch
      %1585 = sbr.rel (0) target = $region25
    $region24: #{tpu_custom_call.1} parent=1 // pred_region
      %s1587 = ssub.s32 32768, 32768
      %1588 = vsyncadd [#allocation5], %s1587
      %s1589 = sshll.u32 [#allocation8], 4
      %s1590 = int_to_ptr.vmem [resolvable:$true] %s1589
      %1595 = dma.vmem_to_hbm [thread:$0]  %s1590, 32768, %s3, [#allocation5], 1024, 1024, 64
    $region25: #{tpu_custom_call.1} parent=1 // pred_fallthru
      _
    // Predicated region
    $region26: #{tpu_custom_call.1} parent=1 // pred_check
      _
    $region27: #{tpu_custom_call.1} parent=1 // pred_check_branch
      %1597 = sbr.rel (0) target = $region29
    $region28: #{tpu_custom_call.1} parent=1 // pred_region
      %1598 = dma.done [#allocation5], 32768
    $region29: #{tpu_custom_call.1} parent=1 // pred_fallthru
      _
    %1599 = vsyncpa [#allocation4], 1
    %1600 = vsyncpa [#allocation7], 1
    %1601 = vsyncpa [#allocation5], 1

</llo_original>
